<compile_context>
chip_gen: v7x
topology: tpu7x:2x2x1
jax: 0.10.0
libtpu: 0.0.40
codegen_flags: <defaults>
</compile_context>

<pallas_src>
import functools

import jax
import jax.numpy as jnp
from jax.experimental import pallas as pl
from jax.experimental.pallas import tpu as pltpu


def _attention_kernel(x_ref, gamma_ref, beta_ref, wq_ref, wk_ref, wv_ref,
                      wo_ref, bo_ref, o_ref, *, heads, eps):
    """One grid step: Bt batch elements. LayerNorm, head-batched QKV projection,
    scaled-dot-product attention + softmax, and the output projection all run
    as aligned batched einsums with (batch*heads) as the single batch dim."""
    Bt, N, D = x_ref.shape
    dh = wq_ref.shape[-1]
    Dp = o_ref.shape[-1]
    BH = Bt * heads

    # ---- LayerNorm over last dim (f32, PyTorch nn.LayerNorm semantics) ----
    x = x_ref[...].astype(jnp.float32)                       # (Bt, N, D)
    mean = jnp.mean(x, axis=-1, keepdims=True)
    var = jnp.mean((x - mean) ** 2, axis=-1, keepdims=True)
    xn = (x - mean) * jax.lax.rsqrt(var + eps)
    xn = xn * gamma_ref[...] + beta_ref[...]                  # (1, D) broadcasts

    # ---- fold (batch, heads) into one einsum batch dim; bf16 MXU operands ----
    xnb = xn.astype(jnp.bfloat16)
    if Bt == 1:
        xh = jnp.broadcast_to(xnb, (heads, N, D))             # (heads, N, D)
        wq, wk, wv, wo = wq_ref[...], wk_ref[...], wv_ref[...], wo_ref[...]
    else:
        xh = jnp.broadcast_to(xnb[:, None], (Bt, heads, N, D)).reshape(BH, N, D)

        def rep(w):  # replicate the per-head weights across the Bt fold
            return jnp.broadcast_to(w[None], (Bt,) + w.shape).reshape(
                (BH,) + w.shape[1:])

        wq, wk, wv, wo = rep(wq_ref[...]), rep(wk_ref[...]), rep(wv_ref[...]), rep(wo_ref[...])

    # ---- QKV projection (scale is pre-folded into wq on the host) ----
    q = jnp.einsum('bnd,bdk->bnk', xh, wq, preferred_element_type=jnp.float32)
    k = jnp.einsum('bnd,bdk->bnk', xh, wk, preferred_element_type=jnp.float32)
    v = jnp.einsum('bnd,bdk->bnk', xh, wv, preferred_element_type=jnp.float32)

    # ---- attention: bf16 MXU inputs, f32 softmax ----
    dots = jnp.einsum('bqd,bkd->bqk', q.astype(jnp.bfloat16),
                      k.astype(jnp.bfloat16),
                      preferred_element_type=jnp.float32)      # (BH, N, N)
    dots = dots - jnp.max(dots, axis=-1, keepdims=True)
    p = jnp.exp(dots)
    inv = pl.reciprocal(jnp.sum(p, axis=-1, keepdims=True), approx=True)
    attn = (p * inv).astype(jnp.bfloat16)

    out = jnp.einsum('bqk,bkd->bqd', attn, v.astype(jnp.bfloat16),
                     preferred_element_type=jnp.float32)       # (BH, N, dh)

    # ---- output projection: per-head matmul then sum over heads
    #      (mathematically identical to concat(heads) @ W_out) ----
    yh = jnp.einsum('bnd,bde->bne', out.astype(jnp.bfloat16), wo,
                    preferred_element_type=jnp.float32)        # (BH, N, Dp)
    y = yh.reshape(Bt, heads, N, Dp).sum(axis=1) + bo_ref[...]  # (Bt, N, Dp)
    o_ref[...] = y.astype(o_ref.dtype)


def _pick_batch_tile(B, N, D, Dp, heads, dim_head, vmem_budget=24 << 20):
    """Largest divisor of B that (a) keeps the per-step working set under a
    conservative VMEM budget and (b) leaves >= 2 grid steps when B >= 2 so both
    v7x TensorCores get work on the 'parallel' batch axis."""
    per_b = 4 * (2 * N * D + 2 * N * Dp              # double-buffered in/out blocks
                 + heads * N * D                     # head-broadcast activations
                 + 3 * heads * N * dim_head          # q, k, v
                 + 2 * heads * N * N                 # scores + probabilities
                 + heads * N * Dp)                   # per-head projected outputs
    cap = max(1, vmem_budget // max(per_b, 1))
    best = 1
    for bt in range(1, B + 1):
        if B % bt:
            continue
        if bt > cap:
            continue
        if B >= 2 and B // bt < 2:
            continue
        best = bt
    return best


def attention_forward(x, params, *, heads, dim_head, eps=1e-5, batch_tile=None):
    B, N, D = x.shape
    inner = heads * dim_head
    scale = dim_head ** (-0.5)
    Dp = ((D + 127) // 128) * 128          # lane-dense (>=128-multiple) output width

    # ---- one-time host-side weight restructuring into aligned per-head blocks ----
    w_qkv = params["w_qkv"].astype(jnp.float32)               # (D, 3*inner), x @ W layout
    wq, wk, wv = jnp.split(w_qkv, 3, axis=-1)                 # each (D, inner)

    def to_heads(w):                                          # (D, inner) -> (heads, D, dh)
        return jnp.transpose(w.reshape(D, heads, dim_head), (1, 0, 2))

    wq = (to_heads(wq) * scale).astype(jnp.bfloat16)          # scale folded into W_q
    wk = to_heads(wk).astype(jnp.bfloat16)
    wv = to_heads(wv).astype(jnp.bfloat16)

    wo = params["w_out"].astype(jnp.float32).reshape(heads, dim_head, D)
    wo = jnp.pad(wo, ((0, 0), (0, 0), (0, Dp - D))).astype(jnp.bfloat16)
    bo = jnp.pad(params["b_out"].astype(jnp.float32), (0, Dp - D)).reshape(1, Dp)
    gamma = params["ln_gamma"].astype(jnp.float32).reshape(1, D)
    beta = params["ln_beta"].astype(jnp.float32).reshape(1, D)

    Bt = batch_tile if batch_tile is not None else _pick_batch_tile(
        B, N, D, Dp, heads, dim_head)
    assert B % Bt == 0, "batch_tile must divide the batch size"
    nb = B // Bt

    kernel = functools.partial(_attention_kernel, heads=heads, eps=eps)

    flops = B * (2 * N * D * 3 * inner          # QKV projection
                 + 4 * heads * N * N * dim_head  # q@k^T and attn@v
                 + 2 * N * inner * D)            # output projection
    transcendentals = B * heads * N * N          # exp in softmax
    bytes_accessed = (4 * B * N * D + 4 * B * N * Dp
                      + 2 * (3 * heads * D * dim_head + heads * dim_head * Dp)
                      + 4 * (2 * D + 2 * Dp))

    out_padded = pl.pallas_call(
        kernel,
        out_shape=jax.ShapeDtypeStruct((B, N, Dp), x.dtype),
        grid=(nb,),
        in_specs=[
            pl.BlockSpec((Bt, N, D), lambda i: (i, 0, 0)),               # x
            pl.BlockSpec((1, D), lambda i: (0, 0)),                      # ln gamma
            pl.BlockSpec((1, D), lambda i: (0, 0)),                      # ln beta
            pl.BlockSpec((heads, D, dim_head), lambda i: (0, 0, 0)),     # w_q (scaled)
            pl.BlockSpec((heads, D, dim_head), lambda i: (0, 0, 0)),     # w_k
            pl.BlockSpec((heads, D, dim_head), lambda i: (0, 0, 0)),     # w_v
            pl.BlockSpec((heads, dim_head, Dp), lambda i: (0, 0, 0)),    # w_out
            pl.BlockSpec((1, Dp), lambda i: (0, 0)),                     # b_out
        ],
        out_specs=pl.BlockSpec((Bt, N, Dp), lambda i: (i, 0, 0)),
        compiler_params=pltpu.CompilerParams(
            dimension_semantics=("parallel",)),
        cost_estimate=pl.CostEstimate(flops=int(flops),
                                      transcendentals=int(transcendentals),
                                      bytes_accessed=int(bytes_accessed)),
    )(x, gamma, beta, wq, wk, wv, wo, bo)

    return out_padded[..., :D] if Dp != D else out_padded


def attention_reference(x, params, *, heads, dim_head, eps=1e-5):
    """Pure-JAX f32 reference mirroring the PyTorch module."""
    B, N, D = x.shape
    inner = heads * dim_head
    scale = dim_head ** (-0.5)
    xf = x.astype(jnp.float32)
    mean = jnp.mean(xf, axis=-1, keepdims=True)
    var = jnp.mean((xf - mean) ** 2, axis=-1, keepdims=True)
    xn = (xf - mean) * jax.lax.rsqrt(var + eps) * params["ln_gamma"] + params["ln_beta"]
    qkv = xn @ params["w_qkv"]                                  # (B, N, 3*inner)
    q, k, v = jnp.split(qkv, 3, axis=-1)

    def to_heads(t):
        return t.reshape(B, N, heads, dim_head).transpose(0, 2, 1, 3)

    q, k, v = map(to_heads, (q, k, v))                          # (B, H, N, dh)
    dots = jnp.einsum("bhqd,bhkd->bhqk", q, k) * scale
    attn = jax.nn.softmax(dots, axis=-1)
    out = jnp.einsum("bhqk,bhkd->bhqd", attn, v)
    out = out.transpose(0, 2, 1, 3).reshape(B, N, inner)
    return (out @ params["w_out"] + params["b_out"]).astype(x.dtype)


if __name__ == "__main__":
    # Small shapes consistent with the module: dim=32, heads=4, dim_head=16.
    heads, dim_head = 4, 16
    D, N = 32, 8
    inner = heads * dim_head

    key = jax.random.PRNGKey(0)
    kx1, kx2, kq, ko, kb, kg, kn = jax.random.split(key, 7)

    params = {
        "ln_gamma": 1.0 + 0.1 * jax.random.normal(kg, (D,), jnp.float32),
        "ln_beta": 0.1 * jax.random.normal(kn, (D,), jnp.float32),
        # Stored in "x @ W" layout (transpose of PyTorch's (out, in) weight).
        "w_qkv": jax.random.normal(kq, (D, 3 * inner), jnp.float32) * 0.05,
        "w_out": jax.random.normal(ko, (inner, D), jnp.float32) * 0.05,
        "b_out": jax.random.normal(kb, (D,), jnp.float32) * 0.05,
    }

    # Case 1: B=2, one batch element per grid step (2 parallel steps).
    x1 = jax.random.normal(kx1, (2, N, D), jnp.float32)
    y1 = jax.block_until_ready(
        attention_forward(x1, params, heads=heads, dim_head=dim_head, batch_tile=1))
    r1 = attention_reference(x1, params, heads=heads, dim_head=dim_head)
    assert jnp.allclose(y1, r1, rtol=2e-2, atol=2e-2), (
        f"case1 max abs err {jnp.max(jnp.abs(y1 - r1))}")

    # Case 2: B=4 with two batch elements folded into each grid step.
    x2 = jax.random.normal(kx2, (4, N, D), jnp.float32)
    y2 = jax.block_until_ready(
        attention_forward(x2, params, heads=heads, dim_head=dim_head, batch_tile=2))
    r2 = attention_reference(x2, params, heads=heads, dim_head=dim_head)
    assert jnp.allclose(y2, r2, rtol=2e-2, atol=2e-2), (
        f"case2 max abs err {jnp.max(jnp.abs(y2 - r2))}")

    print("KERNEL_OK")
</pallas_src>

<mosaic_0001>
module attributes {stable_mosaic.version = 11 : i64} {
  func.func @_attention_kernel(%arg0: i32, %arg1: memref<1x8x32xf32, #tpu.memory_space<vmem>>, %arg2: memref<1x32xf32, #tpu.memory_space<vmem>>, %arg3: memref<1x32xf32, #tpu.memory_space<vmem>>, %arg4: memref<4x32x16xbf16, #tpu.memory_space<vmem>>, %arg5: memref<4x32x16xbf16, #tpu.memory_space<vmem>>, %arg6: memref<4x32x16xbf16, #tpu.memory_space<vmem>>, %arg7: memref<4x16x128xbf16, #tpu.memory_space<vmem>>, %arg8: memref<1x128xf32, #tpu.memory_space<vmem>>, %arg9: memref<1x8x128xf32, #tpu.memory_space<vmem>>) attributes {dimension_semantics = [#tpu.dimension_semantics<parallel>], iteration_bounds = array<i64: 2>, scalar_prefetch = 0 : i64, scratch_operands = 0 : i64, tpu.core_type = #tpu.core_type<tc>, window_params = [{transform_indices = @transform_0, window_bounds = array<i64: 1, 8, 32>}, {pipeline_mode = #tpu.pipeline_mode<synchronous>, transform_indices = @transform_1, window_bounds = array<i64: 1, 32>}, {pipeline_mode = #tpu.pipeline_mode<synchronous>, transform_indices = @transform_2, window_bounds = array<i64: 1, 32>}, {pipeline_mode = #tpu.pipeline_mode<synchronous>, transform_indices = @transform_3, window_bounds = array<i64: 4, 32, 16>}, {pipeline_mode = #tpu.pipeline_mode<synchronous>, transform_indices = @transform_4, window_bounds = array<i64: 4, 32, 16>}, {pipeline_mode = #tpu.pipeline_mode<synchronous>, transform_indices = @transform_5, window_bounds = array<i64: 4, 32, 16>}, {pipeline_mode = #tpu.pipeline_mode<synchronous>, transform_indices = @transform_6, window_bounds = array<i64: 4, 16, 128>}, {pipeline_mode = #tpu.pipeline_mode<synchronous>, transform_indices = @transform_7, window_bounds = array<i64: 1, 128>}, {transform_indices = @transform_8, window_bounds = array<i64: 1, 8, 128>}]} {
    %c0 = arith.constant 0 : index
    %c0_0 = arith.constant 0 : index
    %c0_1 = arith.constant 0 : index
    %0 = vector.load %arg1[%c0, %c0_0, %c0_1] : memref<1x8x32xf32, #tpu.memory_space<vmem>>, vector<1x8x32xf32>
    %cst = arith.constant dense<0.000000e+00> : vector<1x8xf32>
    %1 = vector.multi_reduction <add>, %0, %cst [2] : vector<1x8x32xf32> to vector<1x8xf32>
    %2 = vector.shape_cast %1 : vector<1x8xf32> to vector<1x8x1xf32>
    %cst_2 = arith.constant 3.200000e+01 : f32
    %3 = vector.broadcast %cst_2 : f32 to vector<1x8x1xf32>
    %4 = arith.divf %2, %3 : vector<1x8x1xf32>
    %5 = vector.broadcast %4 : vector<1x8x1xf32> to vector<1x8x32xf32>
    %6 = arith.subf %0, %5 : vector<1x8x32xf32>
    %7 = arith.mulf %6, %6 : vector<1x8x32xf32>
    %cst_3 = arith.constant dense<0.000000e+00> : vector<1x8xf32>
    %8 = vector.multi_reduction <add>, %7, %cst_3 [2] : vector<1x8x32xf32> to vector<1x8xf32>
    %9 = vector.shape_cast %8 : vector<1x8xf32> to vector<1x8x1xf32>
    %cst_4 = arith.constant 3.200000e+01 : f32
    %10 = vector.broadcast %cst_4 : f32 to vector<1x8x1xf32>
    %11 = arith.divf %9, %10 : vector<1x8x1xf32>
    %12 = vector.broadcast %4 : vector<1x8x1xf32> to vector<1x8x32xf32>
    %13 = arith.subf %0, %12 : vector<1x8x32xf32>
    %cst_5 = arith.constant 9.99999974E-6 : f32
    %14 = vector.broadcast %cst_5 : f32 to vector<1x8x1xf32>
    %15 = arith.addf %11, %14 : vector<1x8x1xf32>
    %16 = math.rsqrt %15 : vector<1x8x1xf32>
    %17 = vector.broadcast %16 : vector<1x8x1xf32> to vector<1x8x32xf32>
    %18 = arith.mulf %13, %17 : vector<1x8x32xf32>
    %c0_6 = arith.constant 0 : index
    %c0_7 = arith.constant 0 : index
    %19 = vector.load %arg2[%c0_6, %c0_7] : memref<1x32xf32, #tpu.memory_space<vmem>>, vector<1x32xf32>
    %20 = vector.shape_cast %19 : vector<1x32xf32> to vector<1x1x32xf32>
    %21 = vector.broadcast %20 : vector<1x1x32xf32> to vector<1x8x32xf32>
    %22 = arith.mulf %18, %21 : vector<1x8x32xf32>
    %c0_8 = arith.constant 0 : index
    %c0_9 = arith.constant 0 : index
    %23 = vector.load %arg3[%c0_8, %c0_9] : memref<1x32xf32, #tpu.memory_space<vmem>>, vector<1x32xf32>
    %24 = vector.shape_cast %23 : vector<1x32xf32> to vector<1x1x32xf32>
    %25 = vector.broadcast %24 : vector<1x1x32xf32> to vector<1x8x32xf32>
    %26 = arith.addf %22, %25 : vector<1x8x32xf32>
    %27 = arith.truncf %26 : vector<1x8x32xf32> to vector<1x8x32xbf16>
    %28 = vector.shape_cast %27 : vector<1x8x32xbf16> to vector<1x8x32xbf16>
    %29 = vector.broadcast %28 : vector<1x8x32xbf16> to vector<4x8x32xbf16>
    %c0_10 = arith.constant 0 : index
    %c0_11 = arith.constant 0 : index
    %c0_12 = arith.constant 0 : index
    %30 = vector.load %arg4[%c0_10, %c0_11, %c0_12] : memref<4x32x16xbf16, #tpu.memory_space<vmem>>, vector<4x32x16xbf16>
    %c0_13 = arith.constant 0 : index
    %c0_14 = arith.constant 0 : index
    %c0_15 = arith.constant 0 : index
    %31 = vector.load %arg5[%c0_13, %c0_14, %c0_15] : memref<4x32x16xbf16, #tpu.memory_space<vmem>>, vector<4x32x16xbf16>
    %c0_16 = arith.constant 0 : index
    %c0_17 = arith.constant 0 : index
    %c0_18 = arith.constant 0 : index
    %32 = vector.load %arg6[%c0_16, %c0_17, %c0_18] : memref<4x32x16xbf16, #tpu.memory_space<vmem>>, vector<4x32x16xbf16>
    %c0_19 = arith.constant 0 : index
    %c0_20 = arith.constant 0 : index
    %c0_21 = arith.constant 0 : index
    %33 = vector.load %arg7[%c0_19, %c0_20, %c0_21] : memref<4x16x128xbf16, #tpu.memory_space<vmem>>, vector<4x16x128xbf16>
    "tpu.trace_start"() <{level = 10 : i32, message = "bnd,bdk->bnk"}> : () -> ()
    %cst_22 = arith.constant dense<0.000000e+00> : vector<4x8x16xf32>
    %34 = tpu.matmul %29, %30, %cst_22 {dimension_numbers = #tpu.dot_dimension_numbers<[2], [1], [1], [2], [0, 0, 0, 1, 1, 2], [0], [0]>} : vector<4x8x32xbf16>, vector<4x32x16xbf16>, vector<4x8x16xf32> -> vector<4x8x16xf32>
    %cst_23 = arith.constant dense<0.000000e+00> : vector<4x8x16xf32>
    %35 = tpu.matmul %29, %31, %cst_23 {dimension_numbers = #tpu.dot_dimension_numbers<[2], [1], [1], [2], [0, 0, 0, 1, 1, 2], [0], [0]>} : vector<4x8x32xbf16>, vector<4x32x16xbf16>, vector<4x8x16xf32> -> vector<4x8x16xf32>
    %cst_24 = arith.constant dense<0.000000e+00> : vector<4x8x16xf32>
    %36 = tpu.matmul %29, %32, %cst_24 {dimension_numbers = #tpu.dot_dimension_numbers<[2], [1], [1], [2], [0, 0, 0, 1, 1, 2], [0], [0]>} : vector<4x8x32xbf16>, vector<4x32x16xbf16>, vector<4x8x16xf32> -> vector<4x8x16xf32>
    "tpu.trace_stop"() : () -> ()
    %37 = arith.truncf %34 : vector<4x8x16xf32> to vector<4x8x16xbf16>
    %38 = arith.truncf %35 : vector<4x8x16xf32> to vector<4x8x16xbf16>
    "tpu.trace_start"() <{level = 10 : i32, message = "bqd,bkd->bqk"}> : () -> ()
    %cst_25 = arith.constant dense<0.000000e+00> : vector<4x8x8xf32>
    %39 = tpu.matmul %37, %38, %cst_25 {dimension_numbers = #tpu.dot_dimension_numbers<[2], [2], [1], [1], [0, 0, 0, 1, 1, 1], [0], [0]>} : vector<4x8x16xbf16>, vector<4x8x16xbf16>, vector<4x8x8xf32> -> vector<4x8x8xf32>
    "tpu.trace_stop"() : () -> ()
    %cst_26 = arith.constant dense<0xFF800000> : vector<4x8xf32>
    %40 = vector.multi_reduction <maximumf>, %39, %cst_26 [2] : vector<4x8x8xf32> to vector<4x8xf32>
    %41 = vector.shape_cast %40 : vector<4x8xf32> to vector<4x8x1xf32>
    %42 = vector.broadcast %41 : vector<4x8x1xf32> to vector<4x8x8xf32>
    %43 = arith.subf %39, %42 : vector<4x8x8xf32>
    %44 = math.exp %43 : vector<4x8x8xf32>
    %cst_27 = arith.constant dense<0.000000e+00> : vector<4x8xf32>
    %45 = vector.multi_reduction <add>, %44, %cst_27 [2] : vector<4x8x8xf32> to vector<4x8xf32>
    %46 = vector.shape_cast %45 : vector<4x8xf32> to vector<4x8x1xf32>
    %47 = tpu.reciprocal %46 {approx = true} : vector<4x8x1xf32> -> vector<4x8x1xf32>
    %48 = vector.broadcast %47 : vector<4x8x1xf32> to vector<4x8x8xf32>
    %49 = arith.mulf %44, %48 : vector<4x8x8xf32>
    %50 = arith.truncf %49 : vector<4x8x8xf32> to vector<4x8x8xbf16>
    %51 = arith.truncf %36 : vector<4x8x16xf32> to vector<4x8x16xbf16>
    "tpu.trace_start"() <{level = 10 : i32, message = "bqk,bkd->bqd"}> : () -> ()
    %cst_28 = arith.constant dense<0.000000e+00> : vector<4x8x16xf32>
    %52 = tpu.matmul %50, %51, %cst_28 {dimension_numbers = #tpu.dot_dimension_numbers<[2], [1], [1], [2], [0, 0, 0, 1, 1, 2], [0], [0]>} : vector<4x8x8xbf16>, vector<4x8x16xbf16>, vector<4x8x16xf32> -> vector<4x8x16xf32>
    "tpu.trace_stop"() : () -> ()
    %53 = arith.truncf %52 : vector<4x8x16xf32> to vector<4x8x16xbf16>
    "tpu.trace_start"() <{level = 10 : i32, message = "bnd,bde->bne"}> : () -> ()
    %cst_29 = arith.constant dense<0.000000e+00> : vector<4x8x128xf32>
    %54 = tpu.matmul %53, %33, %cst_29 {dimension_numbers = #tpu.dot_dimension_numbers<[2], [1], [1], [2], [0, 0, 0, 1, 1, 2], [0], [0]>} : vector<4x8x16xbf16>, vector<4x16x128xbf16>, vector<4x8x128xf32> -> vector<4x8x128xf32>
    "tpu.trace_stop"() : () -> ()
    %55 = vector.shape_cast %54 : vector<4x8x128xf32> to vector<1x4x8x128xf32>
    %cst_30 = arith.constant dense<0.000000e+00> : vector<1x8x128xf32>
    %56 = vector.multi_reduction <add>, %55, %cst_30 [1] : vector<1x4x8x128xf32> to vector<1x8x128xf32>
    %c0_31 = arith.constant 0 : index
    %c0_32 = arith.constant 0 : index
    %57 = vector.load %arg8[%c0_31, %c0_32] : memref<1x128xf32, #tpu.memory_space<vmem>>, vector<1x128xf32>
    %58 = vector.shape_cast %57 : vector<1x128xf32> to vector<1x1x128xf32>
    %59 = vector.broadcast %58 : vector<1x1x128xf32> to vector<1x8x128xf32>
    %60 = arith.addf %56, %59 : vector<1x8x128xf32>
    %c0_33 = arith.constant 0 : index
    %c0_34 = arith.constant 0 : index
    %c0_35 = arith.constant 0 : index
    %61 = vector.load %arg9[%c0_33, %c0_34, %c0_35] : memref<1x8x128xf32, #tpu.memory_space<vmem>>, vector<1x8x128xf32>
    tpu.vector_store %arg9[%c0_33, %c0_34, %c0_35], %60 {strides = array<i32>} : memref<1x8x128xf32, #tpu.memory_space<vmem>>, vector<1x8x128xf32>,
    return
  }
  func.func @transform_0(%arg0: i32) -> (i32, i32, i32) {
    %c0_i32 = arith.constant 0 : i32
    %c0_i32_0 = arith.constant 0 : i32
    %c0_i32_1 = arith.constant 0 : i32
    return %arg0, %c0_i32, %c0_i32_0 : i32, i32, i32
  }
  func.func @transform_1(%arg0: i32) -> (i32, i32) {
    %c0_i32 = arith.constant 0 : i32
    %c0_i32_0 = arith.constant 0 : i32
    %c0_i32_1 = arith.constant 0 : i32
    return %c0_i32, %c0_i32_0 : i32, i32
  }
  func.func @transform_2(%arg0: i32) -> (i32, i32) {
    %c0_i32 = arith.constant 0 : i32
    %c0_i32_0 = arith.constant 0 : i32
    %c0_i32_1 = arith.constant 0 : i32
    return %c0_i32, %c0_i32_0 : i32, i32
  }
  func.func @transform_3(%arg0: i32) -> (i32, i32, i32) {
    %c0_i32 = arith.constant 0 : i32
    %c0_i32_0 = arith.constant 0 : i32
    %c0_i32_1 = arith.constant 0 : i32
    %c0_i32_2 = arith.constant 0 : i32
    return %c0_i32, %c0_i32_0, %c0_i32_1 : i32, i32, i32
  }
  func.func @transform_4(%arg0: i32) -> (i32, i32, i32) {
    %c0_i32 = arith.constant 0 : i32
    %c0_i32_0 = arith.constant 0 : i32
    %c0_i32_1 = arith.constant 0 : i32
    %c0_i32_2 = arith.constant 0 : i32
    return %c0_i32, %c0_i32_0, %c0_i32_1 : i32, i32, i32
  }
  func.func @transform_5(%arg0: i32) -> (i32, i32, i32) {
    %c0_i32 = arith.constant 0 : i32
    %c0_i32_0 = arith.constant 0 : i32
    %c0_i32_1 = arith.constant 0 : i32
    %c0_i32_2 = arith.constant 0 : i32
    return %c0_i32, %c0_i32_0, %c0_i32_1 : i32, i32, i32
  }
  func.func @transform_6(%arg0: i32) -> (i32, i32, i32) {
    %c0_i32 = arith.constant 0 : i32
    %c0_i32_0 = arith.constant 0 : i32
    %c0_i32_1 = arith.constant 0 : i32
    %c0_i32_2 = arith.constant 0 : i32
    return %c0_i32, %c0_i32_0, %c0_i32_1 : i32, i32, i32
  }
  func.func @transform_7(%arg0: i32) -> (i32, i32) {
    %c0_i32 = arith.constant 0 : i32
    %c0_i32_0 = arith.constant 0 : i32
    %c0_i32_1 = arith.constant 0 : i32
    return %c0_i32, %c0_i32_0 : i32, i32
  }
  func.func @transform_8(%arg0: i32) -> (i32, i32, i32) {
    %c0_i32 = arith.constant 0 : i32
    %c0_i32_0 = arith.constant 0 : i32
    %c0_i32_1 = arith.constant 0 : i32
    return %arg0, %c0_i32, %c0_i32_0 : i32, i32, i32
  }
}

</mosaic_0001>

<llo_original>
// kernel: tpu_custom_call.1
$region0: #{tpu_custom_call.1}
  #allocation0 [shape = 'u32[]', space=smem, size = 0x4, offset = 0x4, fixed_abs, tag = 'smem constant byte address 0x4 - core index']
  #allocation1 [shape = 'u32[144,128]{1,0:T(1,128)}', space=vmem, size = 0x12000, scoped, tag = 'internal scratch']
  %s0 = inlined_call_operand.vmem [shape: f32[2,8,32], index: 0, kind: input, shape index: {}]
  %s1 = inlined_call_operand.vmem [shape: f32[1,32], index: 1, kind: input, shape index: {}]
  %s2 = inlined_call_operand.vmem [shape: f32[1,32], index: 2, kind: input, shape index: {}]
  %s3 = inlined_call_operand.vmem [shape: bf16[4,32,16], index: 3, kind: input, shape index: {}]
  %s4 = inlined_call_operand.vmem [shape: bf16[4,32,16], index: 4, kind: input, shape index: {}]
  %s5 = inlined_call_operand.vmem [shape: bf16[4,32,16], index: 5, kind: input, shape index: {}]
  %s6 = inlined_call_operand.vmem [shape: bf16[4,16,128], index: 6, kind: input, shape index: {}]
  %s7 = inlined_call_operand.vmem [shape: f32[1,128], index: 7, kind: input, shape index: {}]
  %s8 = inlined_call_operand.hbm [shape: f32[2,8,128], index: 8, kind: output, shape index: {}]
  %s9 = sld [smem:[#allocation0]]
  $region65: #{tpu_custom_call.1} parent=0
    _
  %s11 = ssub.s32 1, %s9
  %s12 = scalar_select 0, %s11, %s9
  $region1: #{tpu_custom_call.1} parent=0
    #allocation2 [shape = 'u8[8192]{0}', space=vmem, size = 0x2000, scoped, tag = 'output window, operand 0']
    #allocation3 [shape = 's32[2]{0}', space=sflag, size = 0x8, scoped, tag = 'scoped memory for tpu_custom_call.1']
    %13 = vsyncpa [#allocation3], 0
    %s14 = scalar_lea.sflag [#allocation3], 1
    %15 = vsyncpa %s14, 0
    loop: start=0, step=1, limit=4
    $region2: #{tpu_custom_call.1} parent=1 // loop_pre_header
      _
    $region3: #{tpu_custom_call.1} parent=1 // loop_header
      %s17 = sphi 0, %s21
      %p18 = scmp.ge.s32.totalorder %s17, 4
      %s27 = sphi 0, %s29
      %s30 = sphi 0, %s27
      %s31 = sphi 0, %s30
      %s47 = sphi 0, %s31
      %s51 = sphi 0, %s51
      %s53 = sphi 0, %s51
      %s54 = sphi 0, %s53
      %s68 = sphi 0, %s54
      %s72 = sphi 0, %s72
      %s74 = sphi 0, %s72
      %s75 = sphi 0, %s74
      %s89 = sphi 0, %s75
      %s93 = sphi 0, %s93
      %s95 = sphi 0, %s93
      %s96 = sphi 0, %s95
      %s110 = sphi 0, %s96
      %s114 = sphi 0, %s114
      %s116 = sphi 0, %s114
      %s117 = sphi 0, %s116
      %s131 = sphi 0, %s117
      %s135 = sphi 0, %s135
      %s137 = sphi 0, %s135
      %s138 = sphi 0, %s137
      %s152 = sphi 0, %s138
      %s156 = sphi 0, %s156
      %s158 = sphi 0, %s156
      %s159 = sphi 0, %s158
      %s173 = sphi 0, %s159
      %s177 = sphi 0, %s177
      %s179 = sphi 0, %s177
      %s180 = sphi 0, %s179
      %s194 = sphi 0, %s180
      %s200 = sphi 0, %s202
      %s203 = sphi 0, %s200
      %s204 = sphi 0, %s203
      %s220 = sphi 0, %s204
    $region4: #{tpu_custom_call.1} parent=1 // loop_header_branch
      %20 = sbr.rel (%p18) target = $region8
    $region5: #{tpu_custom_call.1} parent=1 // loop_body
      %s22 = ssub.s32 %s17, 1
      %s23 = ssub.s32 %s17, 2
      %s24 = sadd.s32 %s17, 1
      %s25 = ssub.s32 %s17, %s24
      %p26 = scmp.eq.s32.totalorder %s25, 0
      %s28 = sadd.s32 %s27, 1
      %s29 = scalar_select %p26, %s27, %s28
      %p32 = pneg %p26
      %p33 = scmp.eq.s32.totalorder %s17, 1
      %p34 = por %p32, %p33
      %p35 = scmp.ne.s32.totalorder %s27, %s30
      %p36 = scmp.eq.s32.totalorder %s17, 0
      %p37 = por %p35, %p36
      %p38 = scmp.ne.s32.totalorder %s27, %s30
      %p39 = scmp.eq.s32.totalorder %s22, 1
      %p40 = por %p38, %p39
      %p41 = scmp.ne.s32.totalorder %s30, %s31
      %p42 = scmp.eq.s32.totalorder %s22, 0
      %p43 = por %p41, %p42
      %p44 = scmp.ne.s32.totalorder %s30, %s31
      %p45 = scmp.eq.s32.totalorder %s23, 1
      %p46 = por %p44, %p45
      %p48 = scmp.ne.s32.totalorder %s31, %s47
      %p49 = scmp.eq.s32.totalorder %s23, 0
      %p50 = por %p48, %p49
      %s52 = sadd.s32 %s51, 1
      %p55 = scmp.eq.s32.totalorder %s17, 1
      %p56 = scmp.ne.s32.totalorder %s51, %s53
      %p57 = scmp.eq.s32.totalorder %s17, 0
      %p58 = por %p56, %p57
      %p59 = scmp.ne.s32.totalorder %s51, %s53
      %p60 = scmp.eq.s32.totalorder %s22, 1
      %p61 = por %p59, %p60
      %p62 = scmp.ne.s32.totalorder %s53, %s54
      %p63 = scmp.eq.s32.totalorder %s22, 0
      %p64 = por %p62, %p63
      %p65 = scmp.ne.s32.totalorder %s53, %s54
      %p66 = scmp.eq.s32.totalorder %s23, 1
      %p67 = por %p65, %p66
      %p69 = scmp.ne.s32.totalorder %s54, %s68
      %p70 = scmp.eq.s32.totalorder %s23, 0
      %p71 = por %p69, %p70
      %s73 = sadd.s32 %s72, 1
      %p76 = scmp.eq.s32.totalorder %s17, 1
      %p77 = scmp.ne.s32.totalorder %s72, %s74
      %p78 = scmp.eq.s32.totalorder %s17, 0
      %p79 = por %p77, %p78
      %p80 = scmp.ne.s32.totalorder %s72, %s74
      %p81 = scmp.eq.s32.totalorder %s22, 1
      %p82 = por %p80, %p81
      %p83 = scmp.ne.s32.totalorder %s74, %s75
      %p84 = scmp.eq.s32.totalorder %s22, 0
      %p85 = por %p83, %p84
      %p86 = scmp.ne.s32.totalorder %s74, %s75
      %p87 = scmp.eq.s32.totalorder %s23, 1
      %p88 = por %p86, %p87
      %p90 = scmp.ne.s32.totalorder %s75, %s89
      %p91 = scmp.eq.s32.totalorder %s23, 0
      %p92 = por %p90, %p91
      %s94 = sadd.s32 %s93, 1
      %p97 = scmp.eq.s32.totalorder %s17, 1
      %p98 = scmp.ne.s32.totalorder %s93, %s95
      %p99 = scmp.eq.s32.totalorder %s17, 0
      %p100 = por %p98, %p99
      %p101 = scmp.ne.s32.totalorder %s93, %s95
      %p102 = scmp.eq.s32.totalorder %s22, 1
      %p103 = por %p101, %p102
      %p104 = scmp.ne.s32.totalorder %s95, %s96
      %p105 = scmp.eq.s32.totalorder %s22, 0
      %p106 = por %p104, %p105
      %p107 = scmp.ne.s32.totalorder %s95, %s96
      %p108 = scmp.eq.s32.totalorder %s23, 1
      %p109 = por %p107, %p108
      %p111 = scmp.ne.s32.totalorder %s96, %s110
      %p112 = scmp.eq.s32.totalorder %s23, 0
      %p113 = por %p111, %p112
      %s115 = sadd.s32 %s114, 1
      %p118 = scmp.eq.s32.totalorder %s17, 1
      %p119 = scmp.ne.s32.totalorder %s114, %s116
      %p120 = scmp.eq.s32.totalorder %s17, 0
      %p121 = por %p119, %p120
      %p122 = scmp.ne.s32.totalorder %s114, %s116
      %p123 = scmp.eq.s32.totalorder %s22, 1
      %p124 = por %p122, %p123
      %p125 = scmp.ne.s32.totalorder %s116, %s117
      %p126 = scmp.eq.s32.totalorder %s22, 0
      %p127 = por %p125, %p126
      %p128 = scmp.ne.s32.totalorder %s116, %s117
      %p129 = scmp.eq.s32.totalorder %s23, 1
      %p130 = por %p128, %p129
      %p132 = scmp.ne.s32.totalorder %s117, %s131
      %p133 = scmp.eq.s32.totalorder %s23, 0
      %p134 = por %p132, %p133
      %s136 = sadd.s32 %s135, 1
      %p139 = scmp.eq.s32.totalorder %s17, 1
      %p140 = scmp.ne.s32.totalorder %s135, %s137
      %p141 = scmp.eq.s32.totalorder %s17, 0
      %p142 = por %p140, %p141
      %p143 = scmp.ne.s32.totalorder %s135, %s137
      %p144 = scmp.eq.s32.totalorder %s22, 1
      %p145 = por %p143, %p144
      %p146 = scmp.ne.s32.totalorder %s137, %s138
      %p147 = scmp.eq.s32.totalorder %s22, 0
      %p148 = por %p146, %p147
      %p149 = scmp.ne.s32.totalorder %s137, %s138
      %p150 = scmp.eq.s32.totalorder %s23, 1
      %p151 = por %p149, %p150
      %p153 = scmp.ne.s32.totalorder %s138, %s152
      %p154 = scmp.eq.s32.totalorder %s23, 0
      %p155 = por %p153, %p154
      %s157 = sadd.s32 %s156, 1
      %p160 = scmp.eq.s32.totalorder %s17, 1
      %p161 = scmp.ne.s32.totalorder %s156, %s158
      %p162 = scmp.eq.s32.totalorder %s17, 0
      %p163 = por %p161, %p162
      %p164 = scmp.ne.s32.totalorder %s156, %s158
      %p165 = scmp.eq.s32.totalorder %s22, 1
      %p166 = por %p164, %p165
      %p167 = scmp.ne.s32.totalorder %s158, %s159
      %p168 = scmp.eq.s32.totalorder %s22, 0
      %p169 = por %p167, %p168
      %p170 = scmp.ne.s32.totalorder %s158, %s159
      %p171 = scmp.eq.s32.totalorder %s23, 1
      %p172 = por %p170, %p171
      %p174 = scmp.ne.s32.totalorder %s159, %s173
      %p175 = scmp.eq.s32.totalorder %s23, 0
      %p176 = por %p174, %p175
      %s178 = sadd.s32 %s177, 1
      %p181 = scmp.eq.s32.totalorder %s17, 1
      %p182 = scmp.ne.s32.totalorder %s177, %s179
      %p183 = scmp.eq.s32.totalorder %s17, 0
      %p184 = por %p182, %p183
      %p185 = scmp.ne.s32.totalorder %s177, %s179
      %p186 = scmp.eq.s32.totalorder %s22, 1
      %p187 = por %p185, %p186
      %p188 = scmp.ne.s32.totalorder %s179, %s180
      %p189 = scmp.eq.s32.totalorder %s22, 0
      %p190 = por %p188, %p189
      %p191 = scmp.ne.s32.totalorder %s179, %s180
      %p192 = scmp.eq.s32.totalorder %s23, 1
      %p193 = por %p191, %p192
      %p195 = scmp.ne.s32.totalorder %s180, %s194
      %p196 = scmp.eq.s32.totalorder %s23, 0
      %p197 = por %p195, %p196
      %s198 = ssub.s32 %s17, %s24
      %p199 = scmp.eq.s32.totalorder %s198, 0
      %s201 = sadd.s32 %s200, 1
      %s202 = scalar_select %p199, %s200, %s201
      %p205 = pneg %p199
      %p206 = scmp.eq.s32.totalorder %s17, 1
      %p207 = por %p205, %p206
      %p208 = scmp.ne.s32.totalorder %s200, %s203
      %p209 = scmp.eq.s32.totalorder %s17, 0
      %p210 = por %p208, %p209
      %p211 = scmp.ne.s32.totalorder %s200, %s203
      %p212 = scmp.eq.s32.totalorder %s22, 1
      %p213 = por %p211, %p212
      %p214 = scmp.ne.s32.totalorder %s203, %s204
      %p215 = scmp.eq.s32.totalorder %s22, 0
      %p216 = por %p214, %p215
      %p217 = scmp.ne.s32.totalorder %s203, %s204
      %p218 = scmp.eq.s32.totalorder %s23, 1
      %p219 = por %p217, %p218
      %p221 = scmp.ne.s32.totalorder %s204, %s220
      %p222 = scmp.eq.s32.totalorder %s23, 0
      %p223 = por %p221, %p222
      %p224 = scmp.le.s32.totalorder 1, %s17
      %p225 = scmp.lt.s32.totalorder %s17, 3
      %p226 = pnand %p224, %p225
      %p227 = pneg %p226
      // Predicated region
      $region9: #{tpu_custom_call.1} parent=5 // pred_check
        _
      $region10: #{tpu_custom_call.1} parent=5 // pred_check_branch
        %229 = sbr.rel (%p226) target = $region12
      $region11: #{tpu_custom_call.1} parent=5 // pred_region
        %s230 = ssub.s32 %s17, 1
        // Predicated region
        $region13: #{tpu_custom_call.1} parent=11 // pred_check
          %p231 = pneg %p64
        $region14: #{tpu_custom_call.1} parent=11 // pred_check_branch
          %233 = sbr.rel (%p231) target = $region16
        $region15: #{tpu_custom_call.1} parent=11 // pred_region
          _
        $region16: #{tpu_custom_call.1} parent=11 // pred_fallthru
          _
        // Predicated region
        $region17: #{tpu_custom_call.1} parent=11 // pred_check
          %p234 = pneg %p85
        $region18: #{tpu_custom_call.1} parent=11 // pred_check_branch
          %236 = sbr.rel (%p234) target = $region20
        $region19: #{tpu_custom_call.1} parent=11 // pred_region
          _
        $region20: #{tpu_custom_call.1} parent=11 // pred_fallthru
          _
        // Predicated region
        $region21: #{tpu_custom_call.1} parent=11 // pred_check
          %p237 = pneg %p106
        $region22: #{tpu_custom_call.1} parent=11 // pred_check_branch
          %239 = sbr.rel (%p237) target = $region24
        $region23: #{tpu_custom_call.1} parent=11 // pred_region
          _
        $region24: #{tpu_custom_call.1} parent=11 // pred_fallthru
          _
        // Predicated region
        $region25: #{tpu_custom_call.1} parent=11 // pred_check
          %p240 = pneg %p127
        $region26: #{tpu_custom_call.1} parent=11 // pred_check_branch
          %242 = sbr.rel (%p240) target = $region28
        $region27: #{tpu_custom_call.1} parent=11 // pred_region
          _
        $region28: #{tpu_custom_call.1} parent=11 // pred_fallthru
          _
        // Predicated region
        $region29: #{tpu_custom_call.1} parent=11 // pred_check
          %p243 = pneg %p148
        $region30: #{tpu_custom_call.1} parent=11 // pred_check_branch
          %245 = sbr.rel (%p243) target = $region32
        $region31: #{tpu_custom_call.1} parent=11 // pred_region
          _
        $region32: #{tpu_custom_call.1} parent=11 // pred_fallthru
          _
        // Predicated region
        $region33: #{tpu_custom_call.1} parent=11 // pred_check
          %p246 = pneg %p169
        $region34: #{tpu_custom_call.1} parent=11 // pred_check_branch
          %248 = sbr.rel (%p246) target = $region36
        $region35: #{tpu_custom_call.1} parent=11 // pred_region
          _
        $region36: #{tpu_custom_call.1} parent=11 // pred_fallthru
          _
        // Predicated region
        $region37: #{tpu_custom_call.1} parent=11 // pred_check
          %p249 = pneg %p190
        $region38: #{tpu_custom_call.1} parent=11 // pred_check_branch
          %251 = sbr.rel (%p249) target = $region40
        $region39: #{tpu_custom_call.1} parent=11 // pred_region
          _
        $region40: #{tpu_custom_call.1} parent=11 // pred_fallthru
          _
      $region12: #{tpu_custom_call.1} parent=5 // pred_fallthru
        _
      %p252 = scmp.lt.s32.totalorder %s17, 2
      // Predicated region
      $region41: #{tpu_custom_call.1} parent=5 // pred_check
        %p253 = pneg %p252
      $region42: #{tpu_custom_call.1} parent=5 // pred_check_branch
        %255 = sbr.rel (%p253) target = $region44
      $region43: #{tpu_custom_call.1} parent=5 // pred_region
        // Predicated region
        $region45: #{tpu_custom_call.1} parent=43 // pred_check
          %p256 = pneg %p37
        $region46: #{tpu_custom_call.1} parent=43 // pred_check_branch
          %258 = sbr.rel (%p256) target = $region48
        $region47: #{tpu_custom_call.1} parent=43 // pred_region
          %p259 = scmp.lt.s32.totalorder %s17, 1
          %s260 = scalar_select %p259, %s17, 1
          %s261 = smul.addr %s260, 8
          %s262 = scalar_lea.vmem %s0, %s261
        $region48: #{tpu_custom_call.1} parent=43 // pred_fallthru
          _
      $region44: #{tpu_custom_call.1} parent=5 // pred_fallthru
        _
      %p263 = scmp.le.s32.totalorder 1, %s17
      %p264 = scmp.lt.s32.totalorder %s17, 3
      %p265 = pnand %p263, %p264
      %p266 = pneg %p265
      // Predicated region
      $region49: #{tpu_custom_call.1} parent=5 // pred_check
        _
      $region50: #{tpu_custom_call.1} parent=5 // pred_check_branch
        %268 = sbr.rel (%p265) target = $region52
      $region51: #{tpu_custom_call.1} parent=5 // pred_region
        %s269 = ssub.s32 %s17, 1
        %p270 = scmp.lt.s32.totalorder %s22, 1
        %s271 = scalar_select %p270, %s22, 1
        %s272 = smul.addr %s271, 8
        %s273 = scalar_lea.vmem %s0, %s272
        %p274 = pneg %p43
        %p275 = pneg %p40
        %p276 = pneg %p64
        %p277 = pneg %p61
        %p278 = pneg %p85
        %p279 = pneg %p82
        %p280 = pneg %p106
        %p281 = pneg %p103
        %p282 = pneg %p127
        %p283 = pneg %p124
        %p284 = pneg %p148
        %p285 = pneg %p145
        %p286 = pneg %p169
        %p287 = pneg %p166
        %p288 = pneg %p190
        %p289 = pneg %p187
        %p290 = pneg %p216
        %p291 = pneg %p213
        %s292 = sand.u32 %s203, 1
        %s293 = scalar_lea.sflag [#allocation3], %s292
        %s294 = sand.u32 %s203, 1
        %s295 = smul.addr %s294, 8
        %s296 = scalar_lea.vmem [#allocation2], %s295
        %p297 = scmp.lt.s32.totalorder %s22, 1
        %s298 = scalar_select %p297, %s22, 1
        %s299 = smul.addr %s298, 8
        %s300 = scalar_lea.vmem %s0, %s299
        %v302 = vld [vmem:[%s300] sm:$0xff]
        %vm303 = vcmask 261120
        %v304 = vsel %vm303, %v302, 0.0
        %305 = vadd.xlane.f32.xlu0 %v304
        %v306 = vpop.xlane.xlu0 %305
        %v307 = vrcp.pop 32.0
        %v308 = vmul.f32 %v306, %v307
        %v309 = vsub.f32 %v302, %v308
        %v310 = vmul.f32 %v309, %v309
        %v311 = vsel %vm303, %v310, 0.0
        %312 = vadd.xlane.f32.xlu0 %v311
        %v313 = vpop.xlane.xlu0 %312
        %v314 = vmul.f32 %v313, %v307
        %v315 = vadd.f32 %v314, 1e-05
        %v316 = vrsqrt.pop %v315
        %v317 = vmul.f32 %v309, %v316
        %v318 = vld [vmem:[%s1] sm:$0x1]
        %v320 = vlaneseq
        %v321 = vshrl.u32 %v320, 7
        %v322 = vsub.s32 0, %v321
        %v323 = vrot.slane %v318, %v322
        %v325 = vmul.f32 %v317, %v323
        %v326 = vld [vmem:[%s2] sm:$0x1]
        %v328 = vlaneseq
        %v329 = vshrl.u32 %v328, 7
        %v330 = vsub.s32 0, %v329
        %v331 = vrot.slane %v326, %v330
        %v333 = vadd.f32 %v325, %v331
        %v334 = vpack.c.bf16 %v333, %v333
        %v335 = vld [vmem:[%s3] sm:$0xf]
        %v336 = vld [vmem:[%s3 + $0x4] sm:$0xf]
        %v337 = vld [vmem:[%s3 + $0x8] sm:$0xf]
        %v338 = vld [vmem:[%s3 + $0xc] sm:$0xf]
        %v339 = vld [vmem:[%s3 + $0x10] sm:$0xf]
        %v340 = vld [vmem:[%s3 + $0x14] sm:$0xf]
        %v341 = vld [vmem:[%s3 + $0x18] sm:$0xf]
        %v342 = vld [vmem:[%s3 + $0x1c] sm:$0xf]
        %v343 = vld [vmem:[%s3 + $0x20] sm:$0xf]
        %v344 = vld [vmem:[%s3 + $0x24] sm:$0xf]
        %v345 = vld [vmem:[%s3 + $0x28] sm:$0xf]
        %v346 = vld [vmem:[%s3 + $0x2c] sm:$0xf]
        %v347 = vld [vmem:[%s3 + $0x30] sm:$0xf]
        %v348 = vld [vmem:[%s3 + $0x34] sm:$0xf]
        %v349 = vld [vmem:[%s3 + $0x38] sm:$0xf]
        %v350 = vld [vmem:[%s3 + $0x3c] sm:$0xf]
        %v351 = vld [vmem:[%s4] sm:$0xf]
        %v352 = vld [vmem:[%s4 + $0x4] sm:$0xf]
        %v353 = vld [vmem:[%s4 + $0x8] sm:$0xf]
        %v354 = vld [vmem:[%s4 + $0xc] sm:$0xf]
        %v355 = vld [vmem:[%s4 + $0x10] sm:$0xf]
        %v356 = vld [vmem:[%s4 + $0x14] sm:$0xf]
        %v357 = vld [vmem:[%s4 + $0x18] sm:$0xf]
        %v358 = vld [vmem:[%s4 + $0x1c] sm:$0xf]
        %v359 = vld [vmem:[%s4 + $0x20] sm:$0xf]
        %v360 = vld [vmem:[%s4 + $0x24] sm:$0xf]
        %v361 = vld [vmem:[%s4 + $0x28] sm:$0xf]
        %v362 = vld [vmem:[%s4 + $0x2c] sm:$0xf]
        %v363 = vld [vmem:[%s4 + $0x30] sm:$0xf]
        %v364 = vld [vmem:[%s4 + $0x34] sm:$0xf]
        %v365 = vld [vmem:[%s4 + $0x38] sm:$0xf]
        %v366 = vld [vmem:[%s4 + $0x3c] sm:$0xf]
        %v367 = vld [vmem:[%s5] sm:$0xf]
        %v368 = vld [vmem:[%s5 + $0x4] sm:$0xf]
        %v369 = vld [vmem:[%s5 + $0x8] sm:$0xf]
        %v370 = vld [vmem:[%s5 + $0xc] sm:$0xf]
        %v371 = vld [vmem:[%s5 + $0x10] sm:$0xf]
        %v372 = vld [vmem:[%s5 + $0x14] sm:$0xf]
        %v373 = vld [vmem:[%s5 + $0x18] sm:$0xf]
        %v374 = vld [vmem:[%s5 + $0x1c] sm:$0xf]
        %v375 = vld [vmem:[%s5 + $0x20] sm:$0xf]
        %v376 = vld [vmem:[%s5 + $0x24] sm:$0xf]
        %v377 = vld [vmem:[%s5 + $0x28] sm:$0xf]
        %v378 = vld [vmem:[%s5 + $0x2c] sm:$0xf]
        %v379 = vld [vmem:[%s5 + $0x30] sm:$0xf]
        %v380 = vld [vmem:[%s5 + $0x34] sm:$0xf]
        %v381 = vld [vmem:[%s5 + $0x38] sm:$0xf]
        %v382 = vld [vmem:[%s5 + $0x3c] sm:$0xf]
        %v383 = vld [vmem:[%s6] sm:$0xf]
        %v384 = vld [vmem:[%s6 + $0x4] sm:$0xf]
        %v385 = vld [vmem:[%s6 + $0x8] sm:$0xf]
        %v386 = vld [vmem:[%s6 + $0xc] sm:$0xf]
        %v387 = vld [vmem:[%s6 + $0x10] sm:$0xf]
        %v388 = vld [vmem:[%s6 + $0x14] sm:$0xf]
        %v389 = vld [vmem:[%s6 + $0x18] sm:$0xf]
        %v390 = vld [vmem:[%s6 + $0x1c] sm:$0xf]
        %v395 = vunpack.c.l.b16 %v335
        %v396 = vunpack.c.l.b16 %v336
        %v397 = vunpack.c.l.b16 %v337
        %v398 = vunpack.c.l.b16 %v338
        %v399 = vpack.c.b16 %v396, %v395
        %v400 = vpack.c.b16 %v398, %v397
        %v404 = vsel %vm303, %v334, 0
        %406 = vmatprep.subr.bf16.mxu0 0
        %407 = vmatpush1.bf16.msra.mxu0 %v399
        %408 = vmatprep.subr.bf16.mxu0 0
        %409 = vmatpush1.bf16.msra.mxu0 %v400
        %410 = vmatprep.subr.bf16.mxu0 0
        %411 = vmatpush1.bf16.msra.mxu0 0
        %412 = vmatprep.subr.bf16.mxu0 0
        %413 = vmatpush1.bf16.msra.mxu0 0
        %414 = vmatprep.subr.bf16.mxu0 0
        %415 = vmatpush1.bf16.msra.mxu0 0
        %416 = vmatprep.subr.bf16.mxu0 0
        %417 = vmatpush1.bf16.msra.mxu0 0
        %418 = vmatprep.subr.bf16.mxu0 0
        %419 = vmatpush1.bf16.msra.mxu0 0
        %420 = vmatprep.subr.bf16.mxu0 0
        %421 = vmatpush1.bf16.msra.mxu0 0
        %422 = vmatprep.subr.bf16.mxu0 0
        %423 = vmatpush1.bf16.msra.mxu0 0
        %424 = vmatprep.subr.bf16.mxu0 0
        %425 = vmatpush1.bf16.msra.mxu0 0
        %426 = vmatprep.subr.bf16.mxu0 0
        %427 = vmatpush1.bf16.msra.mxu0 0
        %428 = vmatprep.subr.bf16.mxu0 0
        %429 = vmatpush1.bf16.msra.mxu0 0
        %430 = vmatprep.subr.bf16.mxu0 0
        %431 = vmatpush1.bf16.msra.mxu0 0
        %432 = vmatprep.subr.bf16.mxu0 0
        %433 = vmatpush1.bf16.msra.mxu0 0
        %434 = vmatprep.subr.bf16.mxu0 0
        %435 = vmatpush1.bf16.msra.mxu0 0
        %436 = vmatprep.subr.bf16.mxu0 0
        %437 = vmatpush1.bf16.msra.mxu0 0
        %438 = vmatprep.mubr.bf16.mxu0 0
        %439 = vmatmul.mubr.bf16.gmra.mrb[0].mxu0 %v404
        %v440 = vpop.f32.mrb[0].mxu0
        %v441 = vadd.f32 0.0, %v440
        %v442 = vpop.f32.mrb[0].mxu0
        %v443 = vpop.f32.mrb[0].mxu0
        %v444 = vpop.f32.mrb[0].mxu0
        %445 = vdwg.mxu0
        %v450 = vunpack.c.l.b16 %v339
        %v451 = vunpack.c.l.b16 %v340
        %v452 = vunpack.c.l.b16 %v341
        %v453 = vunpack.c.l.b16 %v342
        %v454 = vpack.c.b16 %v451, %v450
        %v455 = vpack.c.b16 %v453, %v452
        %458 = vmatprep.subr.bf16.mxu0 0
        %459 = vmatpush1.bf16.msra.mxu0 %v454
        %460 = vmatprep.subr.bf16.mxu0 0
        %461 = vmatpush1.bf16.msra.mxu0 %v455
        %462 = vmatprep.subr.bf16.mxu0 0
        %463 = vmatpush1.bf16.msra.mxu0 0
        %464 = vmatprep.subr.bf16.mxu0 0
        %465 = vmatpush1.bf16.msra.mxu0 0
        %466 = vmatprep.subr.bf16.mxu0 0
        %467 = vmatpush1.bf16.msra.mxu0 0
        %468 = vmatprep.subr.bf16.mxu0 0
        %469 = vmatpush1.bf16.msra.mxu0 0
        %470 = vmatprep.subr.bf16.mxu0 0
        %471 = vmatpush1.bf16.msra.mxu0 0
        %472 = vmatprep.subr.bf16.mxu0 0
        %473 = vmatpush1.bf16.msra.mxu0 0
        %474 = vmatprep.subr.bf16.mxu0 0
        %475 = vmatpush1.bf16.msra.mxu0 0
        %476 = vmatprep.subr.bf16.mxu0 0
        %477 = vmatpush1.bf16.msra.mxu0 0
        %478 = vmatprep.subr.bf16.mxu0 0
        %479 = vmatpush1.bf16.msra.mxu0 0
        %480 = vmatprep.subr.bf16.mxu0 0
        %481 = vmatpush1.bf16.msra.mxu0 0
        %482 = vmatprep.subr.bf16.mxu0 0
        %483 = vmatpush1.bf16.msra.mxu0 0
        %484 = vmatprep.subr.bf16.mxu0 0
        %485 = vmatpush1.bf16.msra.mxu0 0
        %486 = vmatprep.subr.bf16.mxu0 0
        %487 = vmatpush1.bf16.msra.mxu0 0
        %488 = vmatprep.subr.bf16.mxu0 0
        %489 = vmatpush1.bf16.msra.mxu0 0
        %490 = vmatprep.mubr.bf16.mxu0 0
        %491 = vmatmul.mubr.bf16.gmra.mrb[0].mxu0 %v404
        %v492 = vpop.f32.mrb[0].mxu0
        %v493 = vadd.f32 0.0, %v492
        %v494 = vpop.f32.mrb[0].mxu0
        %v495 = vpop.f32.mrb[0].mxu0
        %v496 = vpop.f32.mrb[0].mxu0
        %497 = vdwg.mxu0
        %v502 = vunpack.c.l.b16 %v343
        %v503 = vunpack.c.l.b16 %v344
        %v504 = vunpack.c.l.b16 %v345
        %v505 = vunpack.c.l.b16 %v346
        %v506 = vpack.c.b16 %v503, %v502
        %v507 = vpack.c.b16 %v505, %v504
        %510 = vmatprep.subr.bf16.mxu0 0
        %511 = vmatpush1.bf16.msra.mxu0 %v506
        %512 = vmatprep.subr.bf16.mxu0 0
        %513 = vmatpush1.bf16.msra.mxu0 %v507
        %514 = vmatprep.subr.bf16.mxu0 0
        %515 = vmatpush1.bf16.msra.mxu0 0
        %516 = vmatprep.subr.bf16.mxu0 0
        %517 = vmatpush1.bf16.msra.mxu0 0
        %518 = vmatprep.subr.bf16.mxu0 0
        %519 = vmatpush1.bf16.msra.mxu0 0
        %520 = vmatprep.subr.bf16.mxu0 0
        %521 = vmatpush1.bf16.msra.mxu0 0
        %522 = vmatprep.subr.bf16.mxu0 0
        %523 = vmatpush1.bf16.msra.mxu0 0
        %524 = vmatprep.subr.bf16.mxu0 0
        %525 = vmatpush1.bf16.msra.mxu0 0
        %526 = vmatprep.subr.bf16.mxu0 0
        %527 = vmatpush1.bf16.msra.mxu0 0
        %528 = vmatprep.subr.bf16.mxu0 0
        %529 = vmatpush1.bf16.msra.mxu0 0
        %530 = vmatprep.subr.bf16.mxu0 0
        %531 = vmatpush1.bf16.msra.mxu0 0
        %532 = vmatprep.subr.bf16.mxu0 0
        %533 = vmatpush1.bf16.msra.mxu0 0
        %534 = vmatprep.subr.bf16.mxu0 0
        %535 = vmatpush1.bf16.msra.mxu0 0
        %536 = vmatprep.subr.bf16.mxu0 0
        %537 = vmatpush1.bf16.msra.mxu0 0
        %538 = vmatprep.subr.bf16.mxu0 0
        %539 = vmatpush1.bf16.msra.mxu0 0
        %540 = vmatprep.subr.bf16.mxu0 0
        %541 = vmatpush1.bf16.msra.mxu0 0
        %542 = vmatprep.mubr.bf16.mxu0 0
        %543 = vmatmul.mubr.bf16.gmra.mrb[0].mxu0 %v404
        %v544 = vpop.f32.mrb[0].mxu0
        %v545 = vadd.f32 0.0, %v544
        %v546 = vpop.f32.mrb[0].mxu0
        %v547 = vpop.f32.mrb[0].mxu0
        %v548 = vpop.f32.mrb[0].mxu0
        %549 = vdwg.mxu0
        %v554 = vunpack.c.l.b16 %v347
        %v555 = vunpack.c.l.b16 %v348
        %v556 = vunpack.c.l.b16 %v349
        %v557 = vunpack.c.l.b16 %v350
        %v558 = vpack.c.b16 %v555, %v554
        %v559 = vpack.c.b16 %v557, %v556
        %562 = vmatprep.subr.bf16.mxu0 0
        %563 = vmatpush1.bf16.msra.mxu0 %v558
        %564 = vmatprep.subr.bf16.mxu0 0
        %565 = vmatpush1.bf16.msra.mxu0 %v559
        %566 = vmatprep.subr.bf16.mxu0 0
        %567 = vmatpush1.bf16.msra.mxu0 0
        %568 = vmatprep.subr.bf16.mxu0 0
        %569 = vmatpush1.bf16.msra.mxu0 0
        %570 = vmatprep.subr.bf16.mxu0 0
        %571 = vmatpush1.bf16.msra.mxu0 0
        %572 = vmatprep.subr.bf16.mxu0 0
        %573 = vmatpush1.bf16.msra.mxu0 0
        %574 = vmatprep.subr.bf16.mxu0 0
        %575 = vmatpush1.bf16.msra.mxu0 0
        %576 = vmatprep.subr.bf16.mxu0 0
        %577 = vmatpush1.bf16.msra.mxu0 0
        %578 = vmatprep.subr.bf16.mxu0 0
        %579 = vmatpush1.bf16.msra.mxu0 0
        %580 = vmatprep.subr.bf16.mxu0 0
        %581 = vmatpush1.bf16.msra.mxu0 0
        %582 = vmatprep.subr.bf16.mxu0 0
        %583 = vmatpush1.bf16.msra.mxu0 0
        %584 = vmatprep.subr.bf16.mxu0 0
        %585 = vmatpush1.bf16.msra.mxu0 0
        %586 = vmatprep.subr.bf16.mxu0 0
        %587 = vmatpush1.bf16.msra.mxu0 0
        %588 = vmatprep.subr.bf16.mxu0 0
        %589 = vmatpush1.bf16.msra.mxu0 0
        %590 = vmatprep.subr.bf16.mxu0 0
        %591 = vmatpush1.bf16.msra.mxu0 0
        %592 = vmatprep.subr.bf16.mxu0 0
        %593 = vmatpush1.bf16.msra.mxu0 0
        %594 = vmatprep.mubr.bf16.mxu0 0
        %595 = vmatmul.mubr.bf16.gmra.mrb[0].mxu0 %v404
        %v596 = vpop.f32.mrb[0].mxu0
        %v597 = vadd.f32 0.0, %v596
        %v598 = vpop.f32.mrb[0].mxu0
        %v599 = vpop.f32.mrb[0].mxu0
        %v600 = vpop.f32.mrb[0].mxu0
        %601 = vdwg.mxu0
        %v606 = vunpack.c.l.b16 %v351
        %v607 = vunpack.c.l.b16 %v352
        %v608 = vunpack.c.l.b16 %v353
        %v609 = vunpack.c.l.b16 %v354
        %v610 = vpack.c.b16 %v607, %v606
        %v611 = vpack.c.b16 %v609, %v608
        %614 = vmatprep.subr.bf16.mxu0 0
        %615 = vmatpush1.bf16.msra.mxu0 %v610
        %616 = vmatprep.subr.bf16.mxu0 0
        %617 = vmatpush1.bf16.msra.mxu0 %v611
        %618 = vmatprep.subr.bf16.mxu0 0
        %619 = vmatpush1.bf16.msra.mxu0 0
        %620 = vmatprep.subr.bf16.mxu0 0
        %621 = vmatpush1.bf16.msra.mxu0 0
        %622 = vmatprep.subr.bf16.mxu0 0
        %623 = vmatpush1.bf16.msra.mxu0 0
        %624 = vmatprep.subr.bf16.mxu0 0
        %625 = vmatpush1.bf16.msra.mxu0 0
        %626 = vmatprep.subr.bf16.mxu0 0
        %627 = vmatpush1.bf16.msra.mxu0 0
        %628 = vmatprep.subr.bf16.mxu0 0
        %629 = vmatpush1.bf16.msra.mxu0 0
        %630 = vmatprep.subr.bf16.mxu0 0
        %631 = vmatpush1.bf16.msra.mxu0 0
        %632 = vmatprep.subr.bf16.mxu0 0
        %633 = vmatpush1.bf16.msra.mxu0 0
        %634 = vmatprep.subr.bf16.mxu0 0
        %635 = vmatpush1.bf16.msra.mxu0 0
        %636 = vmatprep.subr.bf16.mxu0 0
        %637 = vmatpush1.bf16.msra.mxu0 0
        %638 = vmatprep.subr.bf16.mxu0 0
        %639 = vmatpush1.bf16.msra.mxu0 0
        %640 = vmatprep.subr.bf16.mxu0 0
        %641 = vmatpush1.bf16.msra.mxu0 0
        %642 = vmatprep.subr.bf16.mxu0 0
        %643 = vmatpush1.bf16.msra.mxu0 0
        %644 = vmatprep.subr.bf16.mxu0 0
        %645 = vmatpush1.bf16.msra.mxu0 0
        %646 = vmatprep.mubr.bf16.mxu0 0
        %647 = vmatmul.mubr.bf16.gmra.mrb[0].mxu0 %v404
        %v648 = vpop.f32.mrb[0].mxu0
        %v649 = vadd.f32 0.0, %v648
        %v650 = vpop.f32.mrb[0].mxu0
        %v651 = vpop.f32.mrb[0].mxu0
        %v652 = vpop.f32.mrb[0].mxu0
        %653 = vdwg.mxu0
        %v658 = vunpack.c.l.b16 %v355
        %v659 = vunpack.c.l.b16 %v356
        %v660 = vunpack.c.l.b16 %v357
        %v661 = vunpack.c.l.b16 %v358
        %v662 = vpack.c.b16 %v659, %v658
        %v663 = vpack.c.b16 %v661, %v660
        %666 = vmatprep.subr.bf16.mxu0 0
        %667 = vmatpush1.bf16.msra.mxu0 %v662
        %668 = vmatprep.subr.bf16.mxu0 0
        %669 = vmatpush1.bf16.msra.mxu0 %v663
        %670 = vmatprep.subr.bf16.mxu0 0
        %671 = vmatpush1.bf16.msra.mxu0 0
        %672 = vmatprep.subr.bf16.mxu0 0
        %673 = vmatpush1.bf16.msra.mxu0 0
        %674 = vmatprep.subr.bf16.mxu0 0
        %675 = vmatpush1.bf16.msra.mxu0 0
        %676 = vmatprep.subr.bf16.mxu0 0
        %677 = vmatpush1.bf16.msra.mxu0 0
        %678 = vmatprep.subr.bf16.mxu0 0
        %679 = vmatpush1.bf16.msra.mxu0 0
        %680 = vmatprep.subr.bf16.mxu0 0
        %681 = vmatpush1.bf16.msra.mxu0 0
        %682 = vmatprep.subr.bf16.mxu0 0
        %683 = vmatpush1.bf16.msra.mxu0 0
        %684 = vmatprep.subr.bf16.mxu0 0
        %685 = vmatpush1.bf16.msra.mxu0 0
        %686 = vmatprep.subr.bf16.mxu0 0
        %687 = vmatpush1.bf16.msra.mxu0 0
        %688 = vmatprep.subr.bf16.mxu0 0
        %689 = vmatpush1.bf16.msra.mxu0 0
        %690 = vmatprep.subr.bf16.mxu0 0
        %691 = vmatpush1.bf16.msra.mxu0 0
        %692 = vmatprep.subr.bf16.mxu0 0
        %693 = vmatpush1.bf16.msra.mxu0 0
        %694 = vmatprep.subr.bf16.mxu0 0
        %695 = vmatpush1.bf16.msra.mxu0 0
        %696 = vmatprep.subr.bf16.mxu0 0
        %697 = vmatpush1.bf16.msra.mxu0 0
        %698 = vmatprep.mubr.bf16.mxu0 0
        %699 = vmatmul.mubr.bf16.gmra.mrb[0].mxu0 %v404
        %v700 = vpop.f32.mrb[0].mxu0
        %v701 = vadd.f32 0.0, %v700
        %v702 = vpop.f32.mrb[0].mxu0
        %v703 = vpop.f32.mrb[0].mxu0
        %v704 = vpop.f32.mrb[0].mxu0
        %705 = vdwg.mxu0
        %v710 = vunpack.c.l.b16 %v359
        %v711 = vunpack.c.l.b16 %v360
        %v712 = vunpack.c.l.b16 %v361
        %v713 = vunpack.c.l.b16 %v362
        %v714 = vpack.c.b16 %v711, %v710
        %v715 = vpack.c.b16 %v713, %v712
        %718 = vmatprep.subr.bf16.mxu0 0
        %719 = vmatpush1.bf16.msra.mxu0 %v714
        %720 = vmatprep.subr.bf16.mxu0 0
        %721 = vmatpush1.bf16.msra.mxu0 %v715
        %722 = vmatprep.subr.bf16.mxu0 0
        %723 = vmatpush1.bf16.msra.mxu0 0
        %724 = vmatprep.subr.bf16.mxu0 0
        %725 = vmatpush1.bf16.msra.mxu0 0
        %726 = vmatprep.subr.bf16.mxu0 0
        %727 = vmatpush1.bf16.msra.mxu0 0
        %728 = vmatprep.subr.bf16.mxu0 0
        %729 = vmatpush1.bf16.msra.mxu0 0
        %730 = vmatprep.subr.bf16.mxu0 0
        %731 = vmatpush1.bf16.msra.mxu0 0
        %732 = vmatprep.subr.bf16.mxu0 0
        %733 = vmatpush1.bf16.msra.mxu0 0
        %734 = vmatprep.subr.bf16.mxu0 0
        %735 = vmatpush1.bf16.msra.mxu0 0
        %736 = vmatprep.subr.bf16.mxu0 0
        %737 = vmatpush1.bf16.msra.mxu0 0
        %738 = vmatprep.subr.bf16.mxu0 0
        %739 = vmatpush1.bf16.msra.mxu0 0
        %740 = vmatprep.subr.bf16.mxu0 0
        %741 = vmatpush1.bf16.msra.mxu0 0
        %742 = vmatprep.subr.bf16.mxu0 0
        %743 = vmatpush1.bf16.msra.mxu0 0
        %744 = vmatprep.subr.bf16.mxu0 0
        %745 = vmatpush1.bf16.msra.mxu0 0
        %746 = vmatprep.subr.bf16.mxu0 0
        %747 = vmatpush1.bf16.msra.mxu0 0
        %748 = vmatprep.subr.bf16.mxu0 0
        %749 = vmatpush1.bf16.msra.mxu0 0
        %750 = vmatprep.mubr.bf16.mxu0 0
        %751 = vmatmul.mubr.bf16.gmra.mrb[0].mxu0 %v404
        %v752 = vpop.f32.mrb[0].mxu0
        %v753 = vadd.f32 0.0, %v752
        %v754 = vpop.f32.mrb[0].mxu0
        %v755 = vpop.f32.mrb[0].mxu0
        %v756 = vpop.f32.mrb[0].mxu0
        %757 = vdwg.mxu0
        %v762 = vunpack.c.l.b16 %v363
        %v763 = vunpack.c.l.b16 %v364
        %v764 = vunpack.c.l.b16 %v365
        %v765 = vunpack.c.l.b16 %v366
        %v766 = vpack.c.b16 %v763, %v762
        %v767 = vpack.c.b16 %v765, %v764
        %770 = vmatprep.subr.bf16.mxu0 0
        %771 = vmatpush1.bf16.msra.mxu0 %v766
        %772 = vmatprep.subr.bf16.mxu0 0
        %773 = vmatpush1.bf16.msra.mxu0 %v767
        %774 = vmatprep.subr.bf16.mxu0 0
        %775 = vmatpush1.bf16.msra.mxu0 0
        %776 = vmatprep.subr.bf16.mxu0 0
        %777 = vmatpush1.bf16.msra.mxu0 0
        %778 = vmatprep.subr.bf16.mxu0 0
        %779 = vmatpush1.bf16.msra.mxu0 0
        %780 = vmatprep.subr.bf16.mxu0 0
        %781 = vmatpush1.bf16.msra.mxu0 0
        %782 = vmatprep.subr.bf16.mxu0 0
        %783 = vmatpush1.bf16.msra.mxu0 0
        %784 = vmatprep.subr.bf16.mxu0 0
        %785 = vmatpush1.bf16.msra.mxu0 0
        %786 = vmatprep.subr.bf16.mxu0 0
        %787 = vmatpush1.bf16.msra.mxu0 0
        %788 = vmatprep.subr.bf16.mxu0 0
        %789 = vmatpush1.bf16.msra.mxu0 0
        %790 = vmatprep.subr.bf16.mxu0 0
        %791 = vmatpush1.bf16.msra.mxu0 0
        %792 = vmatprep.subr.bf16.mxu0 0
        %793 = vmatpush1.bf16.msra.mxu0 0
        %794 = vmatprep.subr.bf16.mxu0 0
        %795 = vmatpush1.bf16.msra.mxu0 0
        %796 = vmatprep.subr.bf16.mxu0 0
        %797 = vmatpush1.bf16.msra.mxu0 0
        %798 = vmatprep.subr.bf16.mxu0 0
        %799 = vmatpush1.bf16.msra.mxu0 0
        %800 = vmatprep.subr.bf16.mxu0 0
        %801 = vmatpush1.bf16.msra.mxu0 0
        %802 = vmatprep.mubr.bf16.mxu0 0
        %803 = vmatmul.mubr.bf16.gmra.mrb[0].mxu0 %v404
        %v804 = vpop.f32.mrb[0].mxu0
        %v805 = vadd.f32 0.0, %v804
        %v806 = vpop.f32.mrb[0].mxu0
        %v807 = vpop.f32.mrb[0].mxu0
        %v808 = vpop.f32.mrb[0].mxu0
        %809 = vdwg.mxu0
        %v814 = vunpack.c.l.b16 %v367
        %v815 = vunpack.c.l.b16 %v368
        %v816 = vunpack.c.l.b16 %v369
        %v817 = vunpack.c.l.b16 %v370
        %v818 = vpack.c.b16 %v815, %v814
        %v819 = vpack.c.b16 %v817, %v816
        %822 = vmatprep.subr.bf16.mxu0 0
        %823 = vmatpush1.bf16.msra.mxu0 %v818
        %824 = vmatprep.subr.bf16.mxu0 0
        %825 = vmatpush1.bf16.msra.mxu0 %v819
        %826 = vmatprep.subr.bf16.mxu0 0
        %827 = vmatpush1.bf16.msra.mxu0 0
        %828 = vmatprep.subr.bf16.mxu0 0
        %829 = vmatpush1.bf16.msra.mxu0 0
        %830 = vmatprep.subr.bf16.mxu0 0
        %831 = vmatpush1.bf16.msra.mxu0 0
        %832 = vmatprep.subr.bf16.mxu0 0
        %833 = vmatpush1.bf16.msra.mxu0 0
        %834 = vmatprep.subr.bf16.mxu0 0
        %835 = vmatpush1.bf16.msra.mxu0 0
        %836 = vmatprep.subr.bf16.mxu0 0
        %837 = vmatpush1.bf16.msra.mxu0 0
        %838 = vmatprep.subr.bf16.mxu0 0
        %839 = vmatpush1.bf16.msra.mxu0 0
        %840 = vmatprep.subr.bf16.mxu0 0
        %841 = vmatpush1.bf16.msra.mxu0 0
        %842 = vmatprep.subr.bf16.mxu0 0
        %843 = vmatpush1.bf16.msra.mxu0 0
        %844 = vmatprep.subr.bf16.mxu0 0
        %845 = vmatpush1.bf16.msra.mxu0 0
        %846 = vmatprep.subr.bf16.mxu0 0
        %847 = vmatpush1.bf16.msra.mxu0 0
        %848 = vmatprep.subr.bf16.mxu0 0
        %849 = vmatpush1.bf16.msra.mxu0 0
        %850 = vmatprep.subr.bf16.mxu0 0
        %851 = vmatpush1.bf16.msra.mxu0 0
        %852 = vmatprep.subr.bf16.mxu0 0
        %853 = vmatpush1.bf16.msra.mxu0 0
        %854 = vmatprep.mubr.bf16.mxu0 0
        %855 = vmatmul.mubr.bf16.gmra.mrb[0].mxu0 %v404
        %v856 = vpop.f32.mrb[0].mxu0
        %v857 = vadd.f32 0.0, %v856
        %v858 = vpop.f32.mrb[0].mxu0
        %v859 = vpop.f32.mrb[0].mxu0
        %v860 = vpop.f32.mrb[0].mxu0
        %861 = vdwg.mxu0
        %v866 = vunpack.c.l.b16 %v371
        %v867 = vunpack.c.l.b16 %v372
        %v868 = vunpack.c.l.b16 %v373
        %v869 = vunpack.c.l.b16 %v374
        %v870 = vpack.c.b16 %v867, %v866
        %v871 = vpack.c.b16 %v869, %v868
        %874 = vmatprep.subr.bf16.mxu0 0
        %875 = vmatpush1.bf16.msra.mxu0 %v870
        %876 = vmatprep.subr.bf16.mxu0 0
        %877 = vmatpush1.bf16.msra.mxu0 %v871
        %878 = vmatprep.subr.bf16.mxu0 0
        %879 = vmatpush1.bf16.msra.mxu0 0
        %880 = vmatprep.subr.bf16.mxu0 0
        %881 = vmatpush1.bf16.msra.mxu0 0
        %882 = vmatprep.subr.bf16.mxu0 0
        %883 = vmatpush1.bf16.msra.mxu0 0
        %884 = vmatprep.subr.bf16.mxu0 0
        %885 = vmatpush1.bf16.msra.mxu0 0
        %886 = vmatprep.subr.bf16.mxu0 0
        %887 = vmatpush1.bf16.msra.mxu0 0
        %888 = vmatprep.subr.bf16.mxu0 0
        %889 = vmatpush1.bf16.msra.mxu0 0
        %890 = vmatprep.subr.bf16.mxu0 0
        %891 = vmatpush1.bf16.msra.mxu0 0
        %892 = vmatprep.subr.bf16.mxu0 0
        %893 = vmatpush1.bf16.msra.mxu0 0
        %894 = vmatprep.subr.bf16.mxu0 0
        %895 = vmatpush1.bf16.msra.mxu0 0
        %896 = vmatprep.subr.bf16.mxu0 0
        %897 = vmatpush1.bf16.msra.mxu0 0
        %898 = vmatprep.subr.bf16.mxu0 0
        %899 = vmatpush1.bf16.msra.mxu0 0
        %900 = vmatprep.subr.bf16.mxu0 0
        %901 = vmatpush1.bf16.msra.mxu0 0
        %902 = vmatprep.subr.bf16.mxu0 0
        %903 = vmatpush1.bf16.msra.mxu0 0
        %904 = vmatprep.subr.bf16.mxu0 0
        %905 = vmatpush1.bf16.msra.mxu0 0
        %906 = vmatprep.mubr.bf16.mxu0 0
        %907 = vmatmul.mubr.bf16.gmra.mrb[0].mxu0 %v404
        %v908 = vpop.f32.mrb[0].mxu0
        %v909 = vadd.f32 0.0, %v908
        %v910 = vpop.f32.mrb[0].mxu0
        %v911 = vpop.f32.mrb[0].mxu0
        %v912 = vpop.f32.mrb[0].mxu0
        %913 = vdwg.mxu0
        %v918 = vunpack.c.l.b16 %v375
        %v919 = vunpack.c.l.b16 %v376
        %v920 = vunpack.c.l.b16 %v377
        %v921 = vunpack.c.l.b16 %v378
        %v922 = vpack.c.b16 %v919, %v918
        %v923 = vpack.c.b16 %v921, %v920
        %926 = vmatprep.subr.bf16.mxu0 0
        %927 = vmatpush1.bf16.msra.mxu0 %v922
        %928 = vmatprep.subr.bf16.mxu0 0
        %929 = vmatpush1.bf16.msra.mxu0 %v923
        %930 = vmatprep.subr.bf16.mxu0 0
        %931 = vmatpush1.bf16.msra.mxu0 0
        %932 = vmatprep.subr.bf16.mxu0 0
        %933 = vmatpush1.bf16.msra.mxu0 0
        %934 = vmatprep.subr.bf16.mxu0 0
        %935 = vmatpush1.bf16.msra.mxu0 0
        %936 = vmatprep.subr.bf16.mxu0 0
        %937 = vmatpush1.bf16.msra.mxu0 0
        %938 = vmatprep.subr.bf16.mxu0 0
        %939 = vmatpush1.bf16.msra.mxu0 0
        %940 = vmatprep.subr.bf16.mxu0 0
        %941 = vmatpush1.bf16.msra.mxu0 0
        %942 = vmatprep.subr.bf16.mxu0 0
        %943 = vmatpush1.bf16.msra.mxu0 0
        %944 = vmatprep.subr.bf16.mxu0 0
        %945 = vmatpush1.bf16.msra.mxu0 0
        %946 = vmatprep.subr.bf16.mxu0 0
        %947 = vmatpush1.bf16.msra.mxu0 0
        %948 = vmatprep.subr.bf16.mxu0 0
        %949 = vmatpush1.bf16.msra.mxu0 0
        %950 = vmatprep.subr.bf16.mxu0 0
        %951 = vmatpush1.bf16.msra.mxu0 0
        %952 = vmatprep.subr.bf16.mxu0 0
        %953 = vmatpush1.bf16.msra.mxu0 0
        %954 = vmatprep.subr.bf16.mxu0 0
        %955 = vmatpush1.bf16.msra.mxu0 0
        %956 = vmatprep.subr.bf16.mxu0 0
        %957 = vmatpush1.bf16.msra.mxu0 0
        %958 = vmatprep.mubr.bf16.mxu0 0
        %959 = vmatmul.mubr.bf16.gmra.mrb[0].mxu0 %v404
        %v960 = vpop.f32.mrb[0].mxu0
        %v961 = vadd.f32 0.0, %v960
        %v962 = vpop.f32.mrb[0].mxu0
        %v963 = vpop.f32.mrb[0].mxu0
        %v964 = vpop.f32.mrb[0].mxu0
        %965 = vdwg.mxu0
        %v970 = vunpack.c.l.b16 %v379
        %v971 = vunpack.c.l.b16 %v380
        %v972 = vunpack.c.l.b16 %v381
        %v973 = vunpack.c.l.b16 %v382
        %v974 = vpack.c.b16 %v971, %v970
        %v975 = vpack.c.b16 %v973, %v972
        %978 = vmatprep.subr.bf16.mxu0 0
        %979 = vmatpush1.bf16.msra.mxu0 %v974
        %980 = vmatprep.subr.bf16.mxu0 0
        %981 = vmatpush1.bf16.msra.mxu0 %v975
        %982 = vmatprep.subr.bf16.mxu0 0
        %983 = vmatpush1.bf16.msra.mxu0 0
        %984 = vmatprep.subr.bf16.mxu0 0
        %985 = vmatpush1.bf16.msra.mxu0 0
        %986 = vmatprep.subr.bf16.mxu0 0
        %987 = vmatpush1.bf16.msra.mxu0 0
        %988 = vmatprep.subr.bf16.mxu0 0
        %989 = vmatpush1.bf16.msra.mxu0 0
        %990 = vmatprep.subr.bf16.mxu0 0
        %991 = vmatpush1.bf16.msra.mxu0 0
        %992 = vmatprep.subr.bf16.mxu0 0
        %993 = vmatpush1.bf16.msra.mxu0 0
        %994 = vmatprep.subr.bf16.mxu0 0
        %995 = vmatpush1.bf16.msra.mxu0 0
        %996 = vmatprep.subr.bf16.mxu0 0
        %997 = vmatpush1.bf16.msra.mxu0 0
        %998 = vmatprep.subr.bf16.mxu0 0
        %999 = vmatpush1.bf16.msra.mxu0 0
        %1000 = vmatprep.subr.bf16.mxu0 0
        %1001 = vmatpush1.bf16.msra.mxu0 0
        %1002 = vmatprep.subr.bf16.mxu0 0
        %1003 = vmatpush1.bf16.msra.mxu0 0
        %1004 = vmatprep.subr.bf16.mxu0 0
        %1005 = vmatpush1.bf16.msra.mxu0 0
        %1006 = vmatprep.subr.bf16.mxu0 0
        %1007 = vmatpush1.bf16.msra.mxu0 0
        %1008 = vmatprep.subr.bf16.mxu0 0
        %1009 = vmatpush1.bf16.msra.mxu0 0
        %1010 = vmatprep.mubr.bf16.mxu0 0
        %1011 = vmatmul.mubr.bf16.gmra.mrb[0].mxu0 %v404
        %v1012 = vpop.f32.mrb[0].mxu0
        %v1013 = vadd.f32 0.0, %v1012
        %v1014 = vpop.f32.mrb[0].mxu0
        %v1015 = vpop.f32.mrb[0].mxu0
        %v1016 = vpop.f32.mrb[0].mxu0
        %1017 = vdwg.mxu0
        %v1018 = vpack.c.bf16 %v441, %v441
        %v1019 = vpack.c.bf16 %v493, %v493
        %v1020 = vpack.c.bf16 %v545, %v545
        %v1021 = vpack.c.bf16 %v597, %v597
        %v1022 = vpack.c.bf16 %v649, %v649
        %v1023 = vpack.c.bf16 %v701, %v701
        %v1024 = vpack.c.bf16 %v753, %v753
        %v1025 = vpack.c.bf16 %v805, %v805
        %vm1026 = vcmask 130048
        %v1028 = vsel %vm1026, %v1018, 0
        %v1031 = vsel %vm1026, %v1022, 0
        %1033 = vmatprep.subr.bf16.mxu0 0
        %1034 = vmatpush1.bf16.xpose.msra.mxu0 %v1031
        %1035 = vmatprep.subr.bf16.mxu0 0
        %1036 = vmatpush1.bf16.xpose.msra.mxu0 0
        %1037 = vmatprep.subr.bf16.mxu0 0
        %1038 = vmatpush1.bf16.xpose.msra.mxu0 0
        %1039 = vmatprep.subr.bf16.mxu0 0
        %1040 = vmatpush1.bf16.xpose.msra.mxu0 0
        %1041 = vmatprep.subr.bf16.mxu0 0
        %1042 = vmatpush1.bf16.xpose.msra.mxu0 0
        %1043 = vmatprep.subr.bf16.mxu0 0
        %1044 = vmatpush1.bf16.xpose.msra.mxu0 0
        %1045 = vmatprep.subr.bf16.mxu0 0
        %1046 = vmatpush1.bf16.xpose.msra.mxu0 0
        %1047 = vmatprep.subr.bf16.mxu0 0
        %1048 = vmatpush1.bf16.xpose.msra.mxu0 0
        %1049 = vmatprep.subr.bf16.mxu0 0
        %1050 = vmatpush1.bf16.xpose.msra.mxu0 0
        %1051 = vmatprep.subr.bf16.mxu0 0
        %1052 = vmatpush1.bf16.xpose.msra.mxu0 0
        %1053 = vmatprep.subr.bf16.mxu0 0
        %1054 = vmatpush1.bf16.xpose.msra.mxu0 0
        %1055 = vmatprep.subr.bf16.mxu0 0
        %1056 = vmatpush1.bf16.xpose.msra.mxu0 0
        %1057 = vmatprep.subr.bf16.mxu0 0
        %1058 = vmatpush1.bf16.xpose.msra.mxu0 0
        %1059 = vmatprep.subr.bf16.mxu0 0
        %1060 = vmatpush1.bf16.xpose.msra.mxu0 0
        %1061 = vmatprep.subr.bf16.mxu0 0
        %1062 = vmatpush1.bf16.xpose.msra.mxu0 0
        %1063 = vmatprep.subr.bf16.mxu0 0
        %1064 = vmatpush1.bf16.xpose.msra.mxu0 0
        %1065 = vmatprep.mubr.bf16.mxu0 0
        %1066 = vmatmul.mubr.bf16.gmra.mrb[0].mxu0 %v1028
        %v1067 = vpop.f32.mrb[0].mxu0
        %v1068 = vadd.f32 0.0, %v1067
        %v1069 = vpop.f32.mrb[0].mxu0
        %v1070 = vpop.f32.mrb[0].mxu0
        %v1071 = vpop.f32.mrb[0].mxu0
        %1072 = vdwg.mxu0
        %v1074 = vsel %vm1026, %v1019, 0
        %v1077 = vsel %vm1026, %v1023, 0
        %1079 = vmatprep.subr.bf16.mxu0 0
        %1080 = vmatpush1.bf16.xpose.msra.mxu0 %v1077
        %1081 = vmatprep.subr.bf16.mxu0 0
        %1082 = vmatpush1.bf16.xpose.msra.mxu0 0
        %1083 = vmatprep.subr.bf16.mxu0 0
        %1084 = vmatpush1.bf16.xpose.msra.mxu0 0
        %1085 = vmatprep.subr.bf16.mxu0 0
        %1086 = vmatpush1.bf16.xpose.msra.mxu0 0
        %1087 = vmatprep.subr.bf16.mxu0 0
        %1088 = vmatpush1.bf16.xpose.msra.mxu0 0
        %1089 = vmatprep.subr.bf16.mxu0 0
        %1090 = vmatpush1.bf16.xpose.msra.mxu0 0
        %1091 = vmatprep.subr.bf16.mxu0 0
        %1092 = vmatpush1.bf16.xpose.msra.mxu0 0
        %1093 = vmatprep.subr.bf16.mxu0 0
        %1094 = vmatpush1.bf16.xpose.msra.mxu0 0
        %1095 = vmatprep.subr.bf16.mxu0 0
        %1096 = vmatpush1.bf16.xpose.msra.mxu0 0
        %1097 = vmatprep.subr.bf16.mxu0 0
        %1098 = vmatpush1.bf16.xpose.msra.mxu0 0
        %1099 = vmatprep.subr.bf16.mxu0 0
        %1100 = vmatpush1.bf16.xpose.msra.mxu0 0
        %1101 = vmatprep.subr.bf16.mxu0 0
        %1102 = vmatpush1.bf16.xpose.msra.mxu0 0
        %1103 = vmatprep.subr.bf16.mxu0 0
        %1104 = vmatpush1.bf16.xpose.msra.mxu0 0
        %1105 = vmatprep.subr.bf16.mxu0 0
        %1106 = vmatpush1.bf16.xpose.msra.mxu0 0
        %1107 = vmatprep.subr.bf16.mxu0 0
        %1108 = vmatpush1.bf16.xpose.msra.mxu0 0
        %1109 = vmatprep.subr.bf16.mxu0 0
        %1110 = vmatpush1.bf16.xpose.msra.mxu0 0
        %1111 = vmatprep.mubr.bf16.mxu0 0
        %1112 = vmatmul.mubr.bf16.gmra.mrb[0].mxu0 %v1074
        %v1113 = vpop.f32.mrb[0].mxu0
        %v1114 = vadd.f32 0.0, %v1113
        %v1115 = vpop.f32.mrb[0].mxu0
        %v1116 = vpop.f32.mrb[0].mxu0
        %v1117 = vpop.f32.mrb[0].mxu0
        %1118 = vdwg.mxu0
        %v1120 = vsel %vm1026, %v1020, 0
        %v1123 = vsel %vm1026, %v1024, 0
        %1125 = vmatprep.subr.bf16.mxu0 0
        %1126 = vmatpush1.bf16.xpose.msra.mxu0 %v1123
        %1127 = vmatprep.subr.bf16.mxu0 0
        %1128 = vmatpush1.bf16.xpose.msra.mxu0 0
        %1129 = vmatprep.subr.bf16.mxu0 0
        %1130 = vmatpush1.bf16.xpose.msra.mxu0 0
        %1131 = vmatprep.subr.bf16.mxu0 0
        %1132 = vmatpush1.bf16.xpose.msra.mxu0 0
        %1133 = vmatprep.subr.bf16.mxu0 0
        %1134 = vmatpush1.bf16.xpose.msra.mxu0 0
        %1135 = vmatprep.subr.bf16.mxu0 0
        %1136 = vmatpush1.bf16.xpose.msra.mxu0 0
        %1137 = vmatprep.subr.bf16.mxu0 0
        %1138 = vmatpush1.bf16.xpose.msra.mxu0 0
        %1139 = vmatprep.subr.bf16.mxu0 0
        %1140 = vmatpush1.bf16.xpose.msra.mxu0 0
        %1141 = vmatprep.subr.bf16.mxu0 0
        %1142 = vmatpush1.bf16.xpose.msra.mxu0 0
        %1143 = vmatprep.subr.bf16.mxu0 0
        %1144 = vmatpush1.bf16.xpose.msra.mxu0 0
        %1145 = vmatprep.subr.bf16.mxu0 0
        %1146 = vmatpush1.bf16.xpose.msra.mxu0 0
        %1147 = vmatprep.subr.bf16.mxu0 0
        %1148 = vmatpush1.bf16.xpose.msra.mxu0 0
        %1149 = vmatprep.subr.bf16.mxu0 0
        %1150 = vmatpush1.bf16.xpose.msra.mxu0 0
        %1151 = vmatprep.subr.bf16.mxu0 0
        %1152 = vmatpush1.bf16.xpose.msra.mxu0 0
        %1153 = vmatprep.subr.bf16.mxu0 0
        %1154 = vmatpush1.bf16.xpose.msra.mxu0 0
        %1155 = vmatprep.subr.bf16.mxu0 0
        %1156 = vmatpush1.bf16.xpose.msra.mxu0 0
        %1157 = vmatprep.mubr.bf16.mxu0 0
        %1158 = vmatmul.mubr.bf16.gmra.mrb[0].mxu0 %v1120
        %v1159 = vpop.f32.mrb[0].mxu0
        %v1160 = vadd.f32 0.0, %v1159
        %v1161 = vpop.f32.mrb[0].mxu0
        %v1162 = vpop.f32.mrb[0].mxu0
        %v1163 = vpop.f32.mrb[0].mxu0
        %1164 = vdwg.mxu0
        %v1166 = vsel %vm1026, %v1021, 0
        %v1169 = vsel %vm1026, %v1025, 0
        %1171 = vmatprep.subr.bf16.mxu0 0
        %1172 = vmatpush1.bf16.xpose.msra.mxu0 %v1169
        %1173 = vmatprep.subr.bf16.mxu0 0
        %1174 = vmatpush1.bf16.xpose.msra.mxu0 0
        %1175 = vmatprep.subr.bf16.mxu0 0
        %1176 = vmatpush1.bf16.xpose.msra.mxu0 0
        %1177 = vmatprep.subr.bf16.mxu0 0
        %1178 = vmatpush1.bf16.xpose.msra.mxu0 0
        %1179 = vmatprep.subr.bf16.mxu0 0
        %1180 = vmatpush1.bf16.xpose.msra.mxu0 0
        %1181 = vmatprep.subr.bf16.mxu0 0
        %1182 = vmatpush1.bf16.xpose.msra.mxu0 0
        %1183 = vmatprep.subr.bf16.mxu0 0
        %1184 = vmatpush1.bf16.xpose.msra.mxu0 0
        %1185 = vmatprep.subr.bf16.mxu0 0
        %1186 = vmatpush1.bf16.xpose.msra.mxu0 0
        %1187 = vmatprep.subr.bf16.mxu0 0
        %1188 = vmatpush1.bf16.xpose.msra.mxu0 0
        %1189 = vmatprep.subr.bf16.mxu0 0
        %1190 = vmatpush1.bf16.xpose.msra.mxu0 0
        %1191 = vmatprep.subr.bf16.mxu0 0
        %1192 = vmatpush1.bf16.xpose.msra.mxu0 0
        %1193 = vmatprep.subr.bf16.mxu0 0
        %1194 = vmatpush1.bf16.xpose.msra.mxu0 0
        %1195 = vmatprep.subr.bf16.mxu0 0
        %1196 = vmatpush1.bf16.xpose.msra.mxu0 0
        %1197 = vmatprep.subr.bf16.mxu0 0
        %1198 = vmatpush1.bf16.xpose.msra.mxu0 0
        %1199 = vmatprep.subr.bf16.mxu0 0
        %1200 = vmatpush1.bf16.xpose.msra.mxu0 0
        %1201 = vmatprep.subr.bf16.mxu0 0
        %1202 = vmatpush1.bf16.xpose.msra.mxu0 0
        %1203 = vmatprep.mubr.bf16.mxu0 0
        %1204 = vmatmul.mubr.bf16.gmra.mrb[0].mxu0 %v1166
        %v1205 = vpop.f32.mrb[0].mxu0
        %v1206 = vadd.f32 0.0, %v1205
        %v1207 = vpop.f32.mrb[0].mxu0
        %v1208 = vpop.f32.mrb[0].mxu0
        %v1209 = vpop.f32.mrb[0].mxu0
        %1210 = vdwg.mxu0
        %vm1211 = vcmask 64512
        %v1212 = vsel %vm1211, %v1068, -inf
        %1213 = vmax.xlane.f32.xlu0 %v1212
        %v1214 = vpop.xlane.xlu0 %1213
        %v1215 = vsel %vm1211, %v1114, -inf
        %1216 = vmax.xlane.f32.xlu0 %v1215
        %v1217 = vpop.xlane.xlu0 %1216
        %v1218 = vsel %vm1211, %v1160, -inf
        %1219 = vmax.xlane.f32.xlu0 %v1218
        %v1220 = vpop.xlane.xlu0 %1219
        %v1221 = vsel %vm1211, %v1206, -inf
        %1222 = vmax.xlane.f32.xlu0 %v1221
        %v1223 = vpop.xlane.xlu0 %1222
        %v1224 = vsub.f32 %v1068, %v1214
        %v1225 = vsub.f32 %v1114, %v1217
        %v1226 = vsub.f32 %v1160, %v1220
        %v1227 = vsub.f32 %v1206, %v1223
        %v1228 = vmul.f32 %v1224, 1.442695
        %v1229 = vpow.pop %v1228
        %v1230 = vmul.f32 %v1225, 1.442695
        %v1231 = vpow.pop %v1230
        %v1232 = vmul.f32 %v1226, 1.442695
        %v1233 = vpow.pop %v1232
        %v1234 = vmul.f32 %v1227, 1.442695
        %v1235 = vpow.pop %v1234
        %v1236 = vsel %vm1211, %v1229, 0.0
        %1237 = vadd.xlane.f32.xlu0 %v1236
        %v1238 = vpop.xlane.xlu0 %1237
        %v1239 = vsel %vm1211, %v1231, 0.0
        %1240 = vadd.xlane.f32.xlu0 %v1239
        %v1241 = vpop.xlane.xlu0 %1240
        %v1242 = vsel %vm1211, %v1233, 0.0
        %1243 = vadd.xlane.f32.xlu0 %v1242
        %v1244 = vpop.xlane.xlu0 %1243
        %v1245 = vsel %vm1211, %v1235, 0.0
        %1246 = vadd.xlane.f32.xlu0 %v1245
        %v1247 = vpop.xlane.xlu0 %1246
        %v1248 = vrcp.pop %v1238
        %v1249 = vrcp.pop %v1241
        %v1250 = vrcp.pop %v1244
        %v1251 = vrcp.pop %v1247
        %v1252 = vmul.f32 %v1229, %v1248
        %v1253 = vmul.f32 %v1231, %v1249
        %v1254 = vmul.f32 %v1233, %v1250
        %v1255 = vmul.f32 %v1235, %v1251
        %v1256 = vpack.c.bf16 %v1252, %v1252
        %v1257 = vpack.c.bf16 %v1253, %v1253
        %v1258 = vpack.c.bf16 %v1254, %v1254
        %v1259 = vpack.c.bf16 %v1255, %v1255
        %v1260 = vpack.c.bf16 %v857, %v857
        %v1261 = vpack.c.bf16 %v909, %v909
        %v1262 = vpack.c.bf16 %v961, %v961
        %v1263 = vpack.c.bf16 %v1013, %v1013
        %v1265 = vsel %vm1211, %v1256, 0
        %vm1267 = vcmask 1043456
        %v1269 = vsel %vm1267, %v1260, 0
        %1271 = vmatprep.subr.bf16.mxu0 0
        %1272 = vmatpush1.bf16.msra.mxu0 %v1269
        %1273 = vmatprep.subr.bf16.mxu0 0
        %1274 = vmatpush1.bf16.msra.mxu0 0
        %1275 = vmatprep.subr.bf16.mxu0 0
        %1276 = vmatpush1.bf16.msra.mxu0 0
        %1277 = vmatprep.subr.bf16.mxu0 0
        %1278 = vmatpush1.bf16.msra.mxu0 0
        %1279 = vmatprep.subr.bf16.mxu0 0
        %1280 = vmatpush1.bf16.msra.mxu0 0
        %1281 = vmatprep.subr.bf16.mxu0 0
        %1282 = vmatpush1.bf16.msra.mxu0 0
        %1283 = vmatprep.subr.bf16.mxu0 0
        %1284 = vmatpush1.bf16.msra.mxu0 0
        %1285 = vmatprep.subr.bf16.mxu0 0
        %1286 = vmatpush1.bf16.msra.mxu0 0
        %1287 = vmatprep.subr.bf16.mxu0 0
        %1288 = vmatpush1.bf16.msra.mxu0 0
        %1289 = vmatprep.subr.bf16.mxu0 0
        %1290 = vmatpush1.bf16.msra.mxu0 0
        %1291 = vmatprep.subr.bf16.mxu0 0
        %1292 = vmatpush1.bf16.msra.mxu0 0
        %1293 = vmatprep.subr.bf16.mxu0 0
        %1294 = vmatpush1.bf16.msra.mxu0 0
        %1295 = vmatprep.subr.bf16.mxu0 0
        %1296 = vmatpush1.bf16.msra.mxu0 0
        %1297 = vmatprep.subr.bf16.mxu0 0
        %1298 = vmatpush1.bf16.msra.mxu0 0
        %1299 = vmatprep.subr.bf16.mxu0 0
        %1300 = vmatpush1.bf16.msra.mxu0 0
        %1301 = vmatprep.subr.bf16.mxu0 0
        %1302 = vmatpush1.bf16.msra.mxu0 0
        %1303 = vmatprep.mubr.bf16.mxu0 0
        %1304 = vmatmul.mubr.bf16.gmra.mrb[0].mxu0 %v1265
        %v1305 = vpop.f32.mrb[0].mxu0
        %v1306 = vadd.f32 0.0, %v1305
        %v1307 = vpop.f32.mrb[0].mxu0
        %v1308 = vpop.f32.mrb[0].mxu0
        %v1309 = vpop.f32.mrb[0].mxu0
        %1310 = vdwg.mxu0
        %v1312 = vsel %vm1211, %v1257, 0
        %v1315 = vsel %vm1267, %v1261, 0
        %1317 = vmatprep.subr.bf16.mxu0 0
        %1318 = vmatpush1.bf16.msra.mxu0 %v1315
        %1319 = vmatprep.subr.bf16.mxu0 0
        %1320 = vmatpush1.bf16.msra.mxu0 0
        %1321 = vmatprep.subr.bf16.mxu0 0
        %1322 = vmatpush1.bf16.msra.mxu0 0
        %1323 = vmatprep.subr.bf16.mxu0 0
        %1324 = vmatpush1.bf16.msra.mxu0 0
        %1325 = vmatprep.subr.bf16.mxu0 0
        %1326 = vmatpush1.bf16.msra.mxu0 0
        %1327 = vmatprep.subr.bf16.mxu0 0
        %1328 = vmatpush1.bf16.msra.mxu0 0
        %1329 = vmatprep.subr.bf16.mxu0 0
        %1330 = vmatpush1.bf16.msra.mxu0 0
        %1331 = vmatprep.subr.bf16.mxu0 0
        %1332 = vmatpush1.bf16.msra.mxu0 0
        %1333 = vmatprep.subr.bf16.mxu0 0
        %1334 = vmatpush1.bf16.msra.mxu0 0
        %1335 = vmatprep.subr.bf16.mxu0 0
        %1336 = vmatpush1.bf16.msra.mxu0 0
        %1337 = vmatprep.subr.bf16.mxu0 0
        %1338 = vmatpush1.bf16.msra.mxu0 0
        %1339 = vmatprep.subr.bf16.mxu0 0
        %1340 = vmatpush1.bf16.msra.mxu0 0
        %1341 = vmatprep.subr.bf16.mxu0 0
        %1342 = vmatpush1.bf16.msra.mxu0 0
        %1343 = vmatprep.subr.bf16.mxu0 0
        %1344 = vmatpush1.bf16.msra.mxu0 0
        %1345 = vmatprep.subr.bf16.mxu0 0
        %1346 = vmatpush1.bf16.msra.mxu0 0
        %1347 = vmatprep.subr.bf16.mxu0 0
        %1348 = vmatpush1.bf16.msra.mxu0 0
        %1349 = vmatprep.mubr.bf16.mxu0 0
        %1350 = vmatmul.mubr.bf16.gmra.mrb[0].mxu0 %v1312
        %v1351 = vpop.f32.mrb[0].mxu0
        %v1352 = vadd.f32 0.0, %v1351
        %v1353 = vpop.f32.mrb[0].mxu0
        %v1354 = vpop.f32.mrb[0].mxu0
        %v1355 = vpop.f32.mrb[0].mxu0
        %1356 = vdwg.mxu0
        %v1358 = vsel %vm1211, %v1258, 0
        %v1361 = vsel %vm1267, %v1262, 0
        %1363 = vmatprep.subr.bf16.mxu0 0
        %1364 = vmatpush1.bf16.msra.mxu0 %v1361
        %1365 = vmatprep.subr.bf16.mxu0 0
        %1366 = vmatpush1.bf16.msra.mxu0 0
        %1367 = vmatprep.subr.bf16.mxu0 0
        %1368 = vmatpush1.bf16.msra.mxu0 0
        %1369 = vmatprep.subr.bf16.mxu0 0
        %1370 = vmatpush1.bf16.msra.mxu0 0
        %1371 = vmatprep.subr.bf16.mxu0 0
        %1372 = vmatpush1.bf16.msra.mxu0 0
        %1373 = vmatprep.subr.bf16.mxu0 0
        %1374 = vmatpush1.bf16.msra.mxu0 0
        %1375 = vmatprep.subr.bf16.mxu0 0
        %1376 = vmatpush1.bf16.msra.mxu0 0
        %1377 = vmatprep.subr.bf16.mxu0 0
        %1378 = vmatpush1.bf16.msra.mxu0 0
        %1379 = vmatprep.subr.bf16.mxu0 0
        %1380 = vmatpush1.bf16.msra.mxu0 0
        %1381 = vmatprep.subr.bf16.mxu0 0
        %1382 = vmatpush1.bf16.msra.mxu0 0
        %1383 = vmatprep.subr.bf16.mxu0 0
        %1384 = vmatpush1.bf16.msra.mxu0 0
        %1385 = vmatprep.subr.bf16.mxu0 0
        %1386 = vmatpush1.bf16.msra.mxu0 0
        %1387 = vmatprep.subr.bf16.mxu0 0
        %1388 = vmatpush1.bf16.msra.mxu0 0
        %1389 = vmatprep.subr.bf16.mxu0 0
        %1390 = vmatpush1.bf16.msra.mxu0 0
        %1391 = vmatprep.subr.bf16.mxu0 0
        %1392 = vmatpush1.bf16.msra.mxu0 0
        %1393 = vmatprep.subr.bf16.mxu0 0
        %1394 = vmatpush1.bf16.msra.mxu0 0
        %1395 = vmatprep.mubr.bf16.mxu0 0
        %1396 = vmatmul.mubr.bf16.gmra.mrb[0].mxu0 %v1358
        %v1397 = vpop.f32.mrb[0].mxu0
        %v1398 = vadd.f32 0.0, %v1397
        %v1399 = vpop.f32.mrb[0].mxu0
        %v1400 = vpop.f32.mrb[0].mxu0
        %v1401 = vpop.f32.mrb[0].mxu0
        %1402 = vdwg.mxu0
        %v1404 = vsel %vm1211, %v1259, 0
        %v1407 = vsel %vm1267, %v1263, 0
        %1409 = vmatprep.subr.bf16.mxu0 0
        %1410 = vmatpush1.bf16.msra.mxu0 %v1407
        %1411 = vmatprep.subr.bf16.mxu0 0
        %1412 = vmatpush1.bf16.msra.mxu0 0
        %1413 = vmatprep.subr.bf16.mxu0 0
        %1414 = vmatpush1.bf16.msra.mxu0 0
        %1415 = vmatprep.subr.bf16.mxu0 0
        %1416 = vmatpush1.bf16.msra.mxu0 0
        %1417 = vmatprep.subr.bf16.mxu0 0
        %1418 = vmatpush1.bf16.msra.mxu0 0
        %1419 = vmatprep.subr.bf16.mxu0 0
        %1420 = vmatpush1.bf16.msra.mxu0 0
        %1421 = vmatprep.subr.bf16.mxu0 0
        %1422 = vmatpush1.bf16.msra.mxu0 0
        %1423 = vmatprep.subr.bf16.mxu0 0
        %1424 = vmatpush1.bf16.msra.mxu0 0
        %1425 = vmatprep.subr.bf16.mxu0 0
        %1426 = vmatpush1.bf16.msra.mxu0 0
        %1427 = vmatprep.subr.bf16.mxu0 0
        %1428 = vmatpush1.bf16.msra.mxu0 0
        %1429 = vmatprep.subr.bf16.mxu0 0
        %1430 = vmatpush1.bf16.msra.mxu0 0
        %1431 = vmatprep.subr.bf16.mxu0 0
        %1432 = vmatpush1.bf16.msra.mxu0 0
        %1433 = vmatprep.subr.bf16.mxu0 0
        %1434 = vmatpush1.bf16.msra.mxu0 0
        %1435 = vmatprep.subr.bf16.mxu0 0
        %1436 = vmatpush1.bf16.msra.mxu0 0
        %1437 = vmatprep.subr.bf16.mxu0 0
        %1438 = vmatpush1.bf16.msra.mxu0 0
        %1439 = vmatprep.subr.bf16.mxu0 0
        %1440 = vmatpush1.bf16.msra.mxu0 0
        %1441 = vmatprep.mubr.bf16.mxu0 0
        %1442 = vmatmul.mubr.bf16.gmra.mrb[0].mxu0 %v1404
        %v1443 = vpop.f32.mrb[0].mxu0
        %v1444 = vadd.f32 0.0, %v1443
        %v1445 = vpop.f32.mrb[0].mxu0
        %v1446 = vpop.f32.mrb[0].mxu0
        %v1447 = vpop.f32.mrb[0].mxu0
        %1448 = vdwg.mxu0
        %v1449 = vpack.c.bf16 %v1306, %v1306
        %v1450 = vpack.c.bf16 %v1352, %v1352
        %v1451 = vpack.c.bf16 %v1398, %v1398
        %v1452 = vpack.c.bf16 %v1444, %v1444
        %v1455 = vunpack.c.l.b16 %v383
        %v1456 = vunpack.c.l.b16 %v384
        %v1457 = vpack.c.b16 %v1456, %v1455
        %v1460 = vsel %vm1026, %v1449, 0
        %1462 = vmatprep.subr.bf16.mxu0 0
        %1463 = vmatpush1.bf16.msra.mxu0 %v1457
        %1464 = vmatprep.subr.bf16.mxu0 0
        %1465 = vmatpush1.bf16.msra.mxu0 0
        %1466 = vmatprep.subr.bf16.mxu0 0
        %1467 = vmatpush1.bf16.msra.mxu0 0
        %1468 = vmatprep.subr.bf16.mxu0 0
        %1469 = vmatpush1.bf16.msra.mxu0 0
        %1470 = vmatprep.subr.bf16.mxu0 0
        %1471 = vmatpush1.bf16.msra.mxu0 0
        %1472 = vmatprep.subr.bf16.mxu0 0
        %1473 = vmatpush1.bf16.msra.mxu0 0
        %1474 = vmatprep.subr.bf16.mxu0 0
        %1475 = vmatpush1.bf16.msra.mxu0 0
        %1476 = vmatprep.subr.bf16.mxu0 0
        %1477 = vmatpush1.bf16.msra.mxu0 0
        %1478 = vmatprep.subr.bf16.mxu0 0
        %1479 = vmatpush1.bf16.msra.mxu0 0
        %1480 = vmatprep.subr.bf16.mxu0 0
        %1481 = vmatpush1.bf16.msra.mxu0 0
        %1482 = vmatprep.subr.bf16.mxu0 0
        %1483 = vmatpush1.bf16.msra.mxu0 0
        %1484 = vmatprep.subr.bf16.mxu0 0
        %1485 = vmatpush1.bf16.msra.mxu0 0
        %1486 = vmatprep.subr.bf16.mxu0 0
        %1487 = vmatpush1.bf16.msra.mxu0 0
        %1488 = vmatprep.subr.bf16.mxu0 0
        %1489 = vmatpush1.bf16.msra.mxu0 0
        %1490 = vmatprep.subr.bf16.mxu0 0
        %1491 = vmatpush1.bf16.msra.mxu0 0
        %1492 = vmatprep.subr.bf16.mxu0 0
        %1493 = vmatpush1.bf16.msra.mxu0 0
        %1494 = vmatprep.mubr.bf16.mxu0 0
        %1495 = vmatmul.mubr.bf16.gmra.mrb[0].mxu0 %v1460
        %v1496 = vpop.f32.mrb[0].mxu0
        %v1497 = vadd.f32 0.0, %v1496
        %v1498 = vpop.f32.mrb[0].mxu0
        %v1499 = vpop.f32.mrb[0].mxu0
        %v1500 = vpop.f32.mrb[0].mxu0
        %1501 = vdwg.mxu0
        %v1504 = vunpack.c.l.b16 %v385
        %v1505 = vunpack.c.l.b16 %v386
        %v1506 = vpack.c.b16 %v1505, %v1504
        %v1509 = vsel %vm1026, %v1450, 0
        %1511 = vmatprep.subr.bf16.mxu0 0
        %1512 = vmatpush1.bf16.msra.mxu0 %v1506
        %1513 = vmatprep.subr.bf16.mxu0 0
        %1514 = vmatpush1.bf16.msra.mxu0 0
        %1515 = vmatprep.subr.bf16.mxu0 0
        %1516 = vmatpush1.bf16.msra.mxu0 0
        %1517 = vmatprep.subr.bf16.mxu0 0
        %1518 = vmatpush1.bf16.msra.mxu0 0
        %1519 = vmatprep.subr.bf16.mxu0 0
        %1520 = vmatpush1.bf16.msra.mxu0 0
        %1521 = vmatprep.subr.bf16.mxu0 0
        %1522 = vmatpush1.bf16.msra.mxu0 0
        %1523 = vmatprep.subr.bf16.mxu0 0
        %1524 = vmatpush1.bf16.msra.mxu0 0
        %1525 = vmatprep.subr.bf16.mxu0 0
        %1526 = vmatpush1.bf16.msra.mxu0 0
        %1527 = vmatprep.subr.bf16.mxu0 0
        %1528 = vmatpush1.bf16.msra.mxu0 0
        %1529 = vmatprep.subr.bf16.mxu0 0
        %1530 = vmatpush1.bf16.msra.mxu0 0
        %1531 = vmatprep.subr.bf16.mxu0 0
        %1532 = vmatpush1.bf16.msra.mxu0 0
        %1533 = vmatprep.subr.bf16.mxu0 0
        %1534 = vmatpush1.bf16.msra.mxu0 0
        %1535 = vmatprep.subr.bf16.mxu0 0
        %1536 = vmatpush1.bf16.msra.mxu0 0
        %1537 = vmatprep.subr.bf16.mxu0 0
        %1538 = vmatpush1.bf16.msra.mxu0 0
        %1539 = vmatprep.subr.bf16.mxu0 0
        %1540 = vmatpush1.bf16.msra.mxu0 0
        %1541 = vmatprep.subr.bf16.mxu0 0
        %1542 = vmatpush1.bf16.msra.mxu0 0
        %1543 = vmatprep.mubr.bf16.mxu0 0
        %1544 = vmatmul.mubr.bf16.gmra.mrb[0].mxu0 %v1509
        %v1545 = vpop.f32.mrb[0].mxu0
        %v1546 = vadd.f32 0.0, %v1545
        %v1547 = vpop.f32.mrb[0].mxu0
        %v1548 = vpop.f32.mrb[0].mxu0
        %v1549 = vpop.f32.mrb[0].mxu0
        %1550 = vdwg.mxu0
        %v1553 = vunpack.c.l.b16 %v387
        %v1554 = vunpack.c.l.b16 %v388
        %v1555 = vpack.c.b16 %v1554, %v1553
        %v1558 = vsel %vm1026, %v1451, 0
        %1560 = vmatprep.subr.bf16.mxu0 0
        %1561 = vmatpush1.bf16.msra.mxu0 %v1555
        %1562 = vmatprep.subr.bf16.mxu0 0
        %1563 = vmatpush1.bf16.msra.mxu0 0
        %1564 = vmatprep.subr.bf16.mxu0 0
        %1565 = vmatpush1.bf16.msra.mxu0 0
        %1566 = vmatprep.subr.bf16.mxu0 0
        %1567 = vmatpush1.bf16.msra.mxu0 0
        %1568 = vmatprep.subr.bf16.mxu0 0
        %1569 = vmatpush1.bf16.msra.mxu0 0
        %1570 = vmatprep.subr.bf16.mxu0 0
        %1571 = vmatpush1.bf16.msra.mxu0 0
        %1572 = vmatprep.subr.bf16.mxu0 0
        %1573 = vmatpush1.bf16.msra.mxu0 0
        %1574 = vmatprep.subr.bf16.mxu0 0
        %1575 = vmatpush1.bf16.msra.mxu0 0
        %1576 = vmatprep.subr.bf16.mxu0 0
        %1577 = vmatpush1.bf16.msra.mxu0 0
        %1578 = vmatprep.subr.bf16.mxu0 0
        %1579 = vmatpush1.bf16.msra.mxu0 0
        %1580 = vmatprep.subr.bf16.mxu0 0
        %1581 = vmatpush1.bf16.msra.mxu0 0
        %1582 = vmatprep.subr.bf16.mxu0 0
        %1583 = vmatpush1.bf16.msra.mxu0 0
        %1584 = vmatprep.subr.bf16.mxu0 0
        %1585 = vmatpush1.bf16.msra.mxu0 0
        %1586 = vmatprep.subr.bf16.mxu0 0
        %1587 = vmatpush1.bf16.msra.mxu0 0
        %1588 = vmatprep.subr.bf16.mxu0 0
        %1589 = vmatpush1.bf16.msra.mxu0 0
        %1590 = vmatprep.subr.bf16.mxu0 0
        %1591 = vmatpush1.bf16.msra.mxu0 0
        %1592 = vmatprep.mubr.bf16.mxu0 0
        %1593 = vmatmul.mubr.bf16.gmra.mrb[0].mxu0 %v1558
        %v1594 = vpop.f32.mrb[0].mxu0
        %v1595 = vadd.f32 0.0, %v1594
        %v1596 = vpop.f32.mrb[0].mxu0
        %v1597 = vpop.f32.mrb[0].mxu0
        %v1598 = vpop.f32.mrb[0].mxu0
        %1599 = vdwg.mxu0
        %v1602 = vunpack.c.l.b16 %v389
        %v1603 = vunpack.c.l.b16 %v390
        %v1604 = vpack.c.b16 %v1603, %v1602
        %v1607 = vsel %vm1026, %v1452, 0
        %1609 = vmatprep.subr.bf16.mxu0 0
        %1610 = vmatpush1.bf16.msra.mxu0 %v1604
        %1611 = vmatprep.subr.bf16.mxu0 0
        %1612 = vmatpush1.bf16.msra.mxu0 0
        %1613 = vmatprep.subr.bf16.mxu0 0
        %1614 = vmatpush1.bf16.msra.mxu0 0
        %1615 = vmatprep.subr.bf16.mxu0 0
        %1616 = vmatpush1.bf16.msra.mxu0 0
        %1617 = vmatprep.subr.bf16.mxu0 0
        %1618 = vmatpush1.bf16.msra.mxu0 0
        %1619 = vmatprep.subr.bf16.mxu0 0
        %1620 = vmatpush1.bf16.msra.mxu0 0
        %1621 = vmatprep.subr.bf16.mxu0 0
        %1622 = vmatpush1.bf16.msra.mxu0 0
        %1623 = vmatprep.subr.bf16.mxu0 0
        %1624 = vmatpush1.bf16.msra.mxu0 0
        %1625 = vmatprep.subr.bf16.mxu0 0
        %1626 = vmatpush1.bf16.msra.mxu0 0
        %1627 = vmatprep.subr.bf16.mxu0 0
        %1628 = vmatpush1.bf16.msra.mxu0 0
        %1629 = vmatprep.subr.bf16.mxu0 0
        %1630 = vmatpush1.bf16.msra.mxu0 0
        %1631 = vmatprep.subr.bf16.mxu0 0
        %1632 = vmatpush1.bf16.msra.mxu0 0
        %1633 = vmatprep.subr.bf16.mxu0 0
        %1634 = vmatpush1.bf16.msra.mxu0 0
        %1635 = vmatprep.subr.bf16.mxu0 0
        %1636 = vmatpush1.bf16.msra.mxu0 0
        %1637 = vmatprep.subr.bf16.mxu0 0
        %1638 = vmatpush1.bf16.msra.mxu0 0
        %1639 = vmatprep.subr.bf16.mxu0 0
        %1640 = vmatpush1.bf16.msra.mxu0 0
        %1641 = vmatprep.mubr.bf16.mxu0 0
        %1642 = vmatmul.mubr.bf16.gmra.mrb[0].mxu0 %v1607
        %v1643 = vpop.f32.mrb[0].mxu0
        %v1644 = vadd.f32 0.0, %v1643
        %v1645 = vpop.f32.mrb[0].mxu0
        %v1646 = vpop.f32.mrb[0].mxu0
        %v1647 = vpop.f32.mrb[0].mxu0
        %1648 = vdwg.mxu0
        %v1649 = vadd.f32 %v1497, %v1546
        %v1650 = vadd.f32 %v1649, %v1595
        %v1651 = vadd.f32 %v1650, %v1644
        %v1652 = vld [vmem:[%s7] sm:$0x1]
        %v1654 = vlaneseq
        %v1655 = vshrl.u32 %v1654, 7
        %v1656 = vsub.s32 0, %v1655
        %v1657 = vrot.slane %v1652, %v1656
        %v1659 = vadd.f32 %v1651, %v1657
        %1660 = vst [vmem:[%s296] sm:$0xff] %v1659
        %s1661 = sand.u32 %s203, 1
        %s1662 = scalar_lea.sflag [#allocation3], %s1661
        %s1663 = sand.u32 %s203, 1
        %s1664 = smul.addr %s1663, 8
        %s1665 = scalar_lea.vmem [#allocation2], %s1664
        // Predicated region
        $region53: #{tpu_custom_call.1} parent=51 // pred_check
          %p1666 = pneg %p213
        $region54: #{tpu_custom_call.1} parent=51 // pred_check_branch
          %1668 = sbr.rel (%p1666) target = $region56
        $region55: #{tpu_custom_call.1} parent=51 // pred_region
          %s1670 = ssub.s32 128, 128
          %1671 = vsyncadd %s1662, %s1670
          %s1672 = smul.addr %s22, 128
          %s1673 = scalar_lea.hbm %s8, %s1672
          %s1675 = sshll.u32 %s1665, 4
          %s1676 = int_to_ptr.vmem [resolvable:$true] %s1675
          %1678 = dma.vmem_to_hbm [thread:$0]  %s1676, 128, %s1673, %s1662
        $region56: #{tpu_custom_call.1} parent=51 // pred_fallthru
          _
      $region52: #{tpu_custom_call.1} parent=5 // pred_fallthru
        _
      %p1679 = scmp.le.s32.totalorder 2, %s17
      // Predicated region
      $region57: #{tpu_custom_call.1} parent=5 // pred_check
        %p1680 = pneg %p1679
      $region58: #{tpu_custom_call.1} parent=5 // pred_check_branch
        %1682 = sbr.rel (%p1680) target = $region60
      $region59: #{tpu_custom_call.1} parent=5 // pred_region
        %s1683 = ssub.s32 %s17, 2
        // Predicated region
        $region61: #{tpu_custom_call.1} parent=59 // pred_check
          %p1684 = pneg %p219
        $region62: #{tpu_custom_call.1} parent=59 // pred_check_branch
          %1686 = sbr.rel (%p1684) target = $region64
        $region63: #{tpu_custom_call.1} parent=59 // pred_region
          %s1687 = sand.u32 %s204, 1
          %s1688 = scalar_lea.sflag [#allocation3], %s1687
          %s1689 = sand.u32 %s204, 1
          %s1690 = smul.addr %s1689, 8
          %s1691 = scalar_lea.vmem [#allocation2], %s1690
          %1692 = dma.done %s1688, 128
        $region64: #{tpu_custom_call.1} parent=59 // pred_fallthru
          _
      $region60: #{tpu_custom_call.1} parent=5 // pred_fallthru
        _
    $region6: #{tpu_custom_call.1} parent=1 // loop_footer
      %s21 = sadd.s32 1, %s17
    $region7: #{tpu_custom_call.1} parent=1 // loop_footer_branch
      %16 = sbr.rel target = $region3
    $region8: #{tpu_custom_call.1} parent=1 // loop_exit
      _
    %1693 = vsyncpa [#allocation3], 1
    %s1694 = scalar_lea.sflag [#allocation3], 1
    %1695 = vsyncpa %s1694, 1

</llo_original>
